<compile_context>
chip_gen: v7x
topology: tpu7x:2x2x1
jax: 0.10.0
libtpu: 0.0.40
codegen_flags: <defaults>
</compile_context>

<pallas_src>
import functools

import jax
import jax.numpy as jnp
from jax.experimental import pallas as pl
from jax.experimental.pallas import tpu as pltpu


def _ggnn_kernel(time_step,
                 a_ref, h_ref, wbig_ref, bcat_ref, u5_ref, out_ref):
    """Single invocation, whole problem in VMEM; batch folded into node axis.

    a_ref    : (Mp, 2*Mp)  bf16  [A_in_blk | A_out_blk]
    h_ref    : (Mp, Dp)    f32   initial node states (zero padded)
    wbig_ref : (Dp, 7*Dp)  bf16  [W3i|W4i|W5i | W3o|W4o|W5o | U3^T]
    bcat_ref : (1, 3*Dp)   f32   [b3+bu3 | b4+bu3 | b5+bu5]
    u5_ref   : (Dp, Dp)    bf16  U5^T
    out_ref  : (Mp, Dp)    f32
    """
    mp, dp = h_ref.shape
    dp3 = 3 * dp
    bf16 = jnp.bfloat16
    f32 = jnp.float32

    h = h_ref[...]  # (mp, dp) f32 recurrent state

    # Static unroll of the time loop (time_step is a compile-time constant).
    for _ in range(time_step):
        # --- MXU push 1: one wide h-LHS matmul covering all gate weights + U3.
        hw = jnp.dot(h.astype(bf16), wbig_ref[...],
                     preferred_element_type=f32)            # (mp, 7*dp)
        u3h = hw[:, 2 * dp3:]                                # (mp, dp) = h @ U3^T

        # --- MXU push 2: fused adjacency matmul for all three gates.
        #     [A_in | A_out] @ [h@Wc_in ; h@Wc_out]
        hw_stacked = jnp.concatenate(
            [hw[:, :dp3], hw[:, dp3:2 * dp3]], axis=0).astype(bf16)  # (2mp, 3dp)
        lin = (jnp.dot(a_ref[...], hw_stacked,
                       preferred_element_type=f32)
               + bcat_ref[...])                              # (mp, 3*dp)

        zv = jax.nn.sigmoid(lin[:, :dp] + u3h)
        # PyTorch source uses fc_eq3_u (not fc_eq4_u) for rv — preserved.
        rv = jax.nn.sigmoid(lin[:, dp:2 * dp] + u3h)

        # --- MXU push 3: candidate state.
        hv = jnp.tanh(lin[:, 2 * dp:]
                      + jnp.dot((rv * h).astype(bf16), u5_ref[...],
                                preferred_element_type=f32))

        h = (1.0 - zv) * h + zv * hv

    out_ref[...] = h


def ggnn_forward(x, in_matrix, out_matrix, params, time_step):
    """x: (B, N, D) float32. in/out_matrix: (N, N). params: dict of Linear weights."""
    B, N, D = x.shape
    M = B * N
    Mp = ((M + 7) // 8) * 8          # sublane-pad folded node axis
    Dp = ((D + 127) // 128) * 128    # lane-dense feature axis
    f32, bf16 = jnp.float32, jnp.bfloat16

    # ---- adjacency: block-diagonal over batch (exact bmm, shared A), stacked
    #      HORIZONTALLY so one dot against vstack(hW_in, hW_out) covers both.
    eyeB = jnp.eye(B, dtype=f32)
    A_in_blk = jnp.kron(eyeB, in_matrix.astype(f32))        # (M, M)
    A_out_blk = jnp.kron(eyeB, out_matrix.astype(f32))      # (M, M)
    A_hcat = (jnp.zeros((Mp, 2 * Mp), f32)
              .at[:M, :M].set(A_in_blk)
              .at[:M, Mp:Mp + M].set(A_out_blk)
              .astype(bf16))                                 # (Mp, 2*Mp)

    # ---- fused, pre-transposed, zero-padded gate weights (bf16 MXU operands).
    def pad_w(w):                      # (D, D) -> (Dp, Dp), zero-padded, f32
        return jnp.zeros((Dp, Dp), f32).at[:D, :D].set(w.astype(f32))

    def pad_b(b):                      # (D,) -> (Dp,), zero-padded
        return jnp.zeros((Dp,), f32).at[:D].set(b.astype(f32))

    w3, w4, w5 = params["fc_eq3_w_w"], params["fc_eq4_w_w"], params["fc_eq5_w_w"]
    Wc_in = jnp.concatenate([pad_w(w3[:, :D].T), pad_w(w4[:, :D].T),
                             pad_w(w5[:, :D].T)], axis=1)    # (Dp, 3Dp)
    Wc_out = jnp.concatenate([pad_w(w3[:, D:].T), pad_w(w4[:, D:].T),
                              pad_w(w5[:, D:].T)], axis=1)   # (Dp, 3Dp)
    U3T = pad_w(params["fc_eq3_u_w"].T)                      # (Dp, Dp)
    Wbig = jnp.concatenate([Wc_in, Wc_out, U3T], axis=1).astype(bf16)  # (Dp, 7Dp)
    U5T = pad_w(params["fc_eq5_u_w"].T).astype(bf16)         # (Dp, Dp)

    # Fold the u-layer biases into the fused bias:
    #   zv: b3 + bu3   |   rv: b4 + bu3 (fc_eq3_u quirk)   |   hv: b5 + bu5
    bu3 = params["fc_eq3_u_b"]
    bu5 = params["fc_eq5_u_b"]
    bcat = jnp.concatenate([pad_b(params["fc_eq3_w_b"] + bu3),
                            pad_b(params["fc_eq4_w_b"] + bu3),
                            pad_b(params["fc_eq5_w_b"] + bu5)],
                           axis=0).reshape(1, 3 * Dp)        # f32

    # ---- padded initial node state (kept in f32; only MXU operands are bf16).
    h0 = jnp.zeros((Mp, Dp), f32).at[:M, :D].set(x.reshape(M, D).astype(f32))

    def vspec():
        return pl.BlockSpec(memory_space=pltpu.MemorySpace.VMEM)

    out = pl.pallas_call(
        functools.partial(_ggnn_kernel, time_step),
        out_shape=jax.ShapeDtypeStruct((Mp, Dp), f32),
        in_specs=[vspec() for _ in range(5)],
        out_specs=vspec(),
    )(A_hcat, h0, Wbig, bcat, U5T)

    return out[:M, :D].reshape(B, N, D)


def ggnn_reference(x, in_matrix, out_matrix, params, time_step):
    """Pure-JAX re-implementation of the PyTorch forward (f32, HIGHEST precision)."""
    B, N, D = x.shape
    hp = jax.lax.Precision.HIGHEST
    h = x
    A_in = jnp.broadcast_to(in_matrix, (B, N, N))
    A_out = jnp.broadcast_to(out_matrix, (B, N, N))

    def lin(name, v):
        return jnp.dot(v, params[name + "_w"].T, precision=hp) + params[name + "_b"]

    for _ in range(time_step):
        av = jnp.concatenate(
            [jnp.einsum("bij,bjd->bid", A_in, h, precision=hp),
             jnp.einsum("bij,bjd->bid", A_out, h, precision=hp)], axis=2)
        av = av.reshape(B * N, 2 * D)
        fh = h.reshape(B * N, D)
        zv = jax.nn.sigmoid(lin("fc_eq3_w", av) + lin("fc_eq3_u", fh))
        rv = jax.nn.sigmoid(lin("fc_eq4_w", av) + lin("fc_eq3_u", fh))  # quirk preserved
        hv = jnp.tanh(lin("fc_eq5_w", av) + lin("fc_eq5_u", rv * fh))
        fh = (1.0 - zv) * fh + zv * hv
        h = fh.reshape(B, N, D)
    return h


def init_params(key, input_dim):
    D = input_dim
    ks = jax.random.split(key, 12)

    def linear(kw, kb, fan_in, shape_w, shape_b):
        bound = 1.0 / (fan_in ** 0.5)
        w = jax.random.uniform(kw, shape_w, jnp.float32, -bound, bound)
        b = jax.random.uniform(kb, shape_b, jnp.float32, -bound, bound)
        return w, b

    p = {}
    p["fc_eq3_w_w"], p["fc_eq3_w_b"] = linear(ks[0], ks[1], 2 * D, (D, 2 * D), (D,))
    p["fc_eq3_u_w"], p["fc_eq3_u_b"] = linear(ks[2], ks[3], D, (D, D), (D,))
    p["fc_eq4_w_w"], p["fc_eq4_w_b"] = linear(ks[4], ks[5], 2 * D, (D, 2 * D), (D,))
    p["fc_eq4_u_w"], p["fc_eq4_u_b"] = linear(ks[6], ks[7], D, (D, D), (D,))
    p["fc_eq5_w_w"], p["fc_eq5_w_b"] = linear(ks[8], ks[9], 2 * D, (D, 2 * D), (D,))
    p["fc_eq5_u_w"], p["fc_eq5_u_b"] = linear(ks[10], ks[11], D, (D, D), (D,))
    return p


if __name__ == "__main__":
    B, N, D = 2, 8, 32
    TIME_STEP = 3

    key = jax.random.PRNGKey(0)
    k_x, k_in, k_out, k_p = jax.random.split(key, 4)

    x = jax.random.normal(k_x, (B, N, D), jnp.float32)
    # Row-normalized random adjacency-like matrices (as SSGRL typically uses).
    in_matrix = jax.random.uniform(k_in, (N, N), jnp.float32)
    in_matrix = in_matrix / jnp.sum(in_matrix, axis=1, keepdims=True)
    out_matrix = jax.random.uniform(k_out, (N, N), jnp.float32)
    out_matrix = out_matrix / jnp.sum(out_matrix, axis=1, keepdims=True)

    params = init_params(k_p, D)

    fwd = jax.jit(ggnn_forward, static_argnums=(4,))
    out = jax.block_until_ready(fwd(x, in_matrix, out_matrix, params, TIME_STEP))

    ref = jax.block_until_ready(
        ggnn_reference(x, in_matrix, out_matrix, params, TIME_STEP))

    assert out.shape == (B, N, D)
    # bf16 MXU operands (single-pass, per the performance review) vs. the
    # f32 Precision.HIGHEST reference -> relaxed tolerance.
    assert jnp.allclose(out, ref, atol=5e-2, rtol=5e-2), (
        float(jnp.max(jnp.abs(out - ref))))

    print("KERNEL_OK")
</pallas_src>

<mosaic_0001>
module attributes {stable_mosaic.version = 11 : i64} {
  func.func @_ggnn_kernel(%arg0: memref<16x32xbf16, #tpu.memory_space<vmem>>, %arg1: memref<16x128xf32, #tpu.memory_space<vmem>>, %arg2: memref<128x896xbf16, #tpu.memory_space<vmem>>, %arg3: memref<1x384xf32, #tpu.memory_space<vmem>>, %arg4: memref<128x128xbf16, #tpu.memory_space<vmem>>, %arg5: memref<16x128xf32, #tpu.memory_space<vmem>>) attributes {dimension_semantics = [], scalar_prefetch = 0 : i64, scratch_operands = 0 : i64, tpu.core_type = #tpu.core_type<tc>} {
    %c0 = arith.constant 0 : index
    %c0_0 = arith.constant 0 : index
    %0 = vector.load %arg1[%c0, %c0_0] : memref<16x128xf32, #tpu.memory_space<vmem>>, vector<16x128xf32>
    %1 = arith.truncf %0 : vector<16x128xf32> to vector<16x128xbf16>
    %c0_1 = arith.constant 0 : index
    %c0_2 = arith.constant 0 : index
    %2 = vector.load %arg2[%c0_1, %c0_2] : memref<128x896xbf16, #tpu.memory_space<vmem>>, vector<128x896xbf16>
    %cst = arith.constant dense<0.000000e+00> : vector<16x896xf32>
    %3 = tpu.matmul %1, %2, %cst {dimension_numbers = #tpu.dot_dimension_numbers<[1], [0], [0], [1], [0, 0, 1, 1], [], []>} : vector<16x128xbf16>, vector<128x896xbf16>, vector<16x896xf32> -> vector<16x896xf32>
    %4 = vector.extract_strided_slice %3 {offsets = [0, 768], sizes = [16, 128], strides = [1, 1]} : vector<16x896xf32> to vector<16x128xf32>
    %5 = vector.extract_strided_slice %3 {offsets = [0, 0], sizes = [16, 384], strides = [1, 1]} : vector<16x896xf32> to vector<16x384xf32>
    %6 = vector.extract_strided_slice %3 {offsets = [0, 384], sizes = [16, 384], strides = [1, 1]} : vector<16x896xf32> to vector<16x384xf32>
    %7 = tpu.concatenate %5, %6 in 0 : vector<16x384xf32>, vector<16x384xf32> -> vector<32x384xf32>
    %8 = arith.truncf %7 : vector<32x384xf32> to vector<32x384xbf16>
    %c0_3 = arith.constant 0 : index
    %c0_4 = arith.constant 0 : index
    %9 = vector.load %arg0[%c0_3, %c0_4] : memref<16x32xbf16, #tpu.memory_space<vmem>>, vector<16x32xbf16>
    %cst_5 = arith.constant dense<0.000000e+00> : vector<16x384xf32>
    %10 = tpu.matmul %9, %8, %cst_5 {dimension_numbers = #tpu.dot_dimension_numbers<[1], [0], [0], [1], [0, 0, 1, 1], [], []>} : vector<16x32xbf16>, vector<32x384xbf16>, vector<16x384xf32> -> vector<16x384xf32>
    %c0_6 = arith.constant 0 : index
    %c0_7 = arith.constant 0 : index
    %11 = vector.load %arg3[%c0_6, %c0_7] : memref<1x384xf32, #tpu.memory_space<vmem>>, vector<1x384xf32>
    %12 = vector.broadcast %11 : vector<1x384xf32> to vector<16x384xf32>
    %13 = arith.addf %10, %12 : vector<16x384xf32>
    %14 = vector.extract_strided_slice %13 {offsets = [0, 0], sizes = [16, 128], strides = [1, 1]} : vector<16x384xf32> to vector<16x128xf32>
    %15 = arith.addf %14, %4 : vector<16x128xf32>
    %16 = arith.negf %15 : vector<16x128xf32>
    %17 = math.exp %16 : vector<16x128xf32>
    %cst_8 = arith.constant 1.000000e+00 : f32
    %18 = vector.broadcast %cst_8 : f32 to vector<16x128xf32>
    %19 = arith.addf %18, %17 : vector<16x128xf32>
    %20 = arith.divf %18, %19 : vector<16x128xf32>
    %21 = vector.extract_strided_slice %13 {offsets = [0, 128], sizes = [16, 128], strides = [1, 1]} : vector<16x384xf32> to vector<16x128xf32>
    %22 = arith.addf %21, %4 : vector<16x128xf32>
    %23 = arith.negf %22 : vector<16x128xf32>
    %24 = math.exp %23 : vector<16x128xf32>
    %cst_9 = arith.constant 1.000000e+00 : f32
    %25 = vector.broadcast %cst_9 : f32 to vector<16x128xf32>
    %26 = arith.addf %25, %24 : vector<16x128xf32>
    %27 = arith.divf %25, %26 : vector<16x128xf32>
    %28 = vector.extract_strided_slice %13 {offsets = [0, 256], sizes = [16, 128], strides = [1, 1]} : vector<16x384xf32> to vector<16x128xf32>
    %29 = arith.mulf %27, %0 : vector<16x128xf32>
    %30 = arith.truncf %29 : vector<16x128xf32> to vector<16x128xbf16>
    %c0_10 = arith.constant 0 : index
    %c0_11 = arith.constant 0 : index
    %31 = vector.load %arg4[%c0_10, %c0_11] : memref<128x128xbf16, #tpu.memory_space<vmem>>, vector<128x128xbf16>
    %cst_12 = arith.constant dense<0.000000e+00> : vector<16x128xf32>
    %32 = tpu.matmul %30, %31, %cst_12 {dimension_numbers = #tpu.dot_dimension_numbers<[1], [0], [0], [1], [0, 0, 1, 1], [], []>} : vector<16x128xbf16>, vector<128x128xbf16>, vector<16x128xf32> -> vector<16x128xf32>
    %33 = arith.addf %28, %32 : vector<16x128xf32>
    %34 = math.tanh %33 : vector<16x128xf32>
    %cst_13 = arith.constant 1.000000e+00 : f32
    %35 = vector.broadcast %cst_13 : f32 to vector<16x128xf32>
    %36 = arith.subf %35, %20 : vector<16x128xf32>
    %37 = arith.mulf %36, %0 : vector<16x128xf32>
    %38 = arith.mulf %20, %34 : vector<16x128xf32>
    %39 = arith.addf %37, %38 : vector<16x128xf32>
    %40 = arith.truncf %39 : vector<16x128xf32> to vector<16x128xbf16>
    %c0_14 = arith.constant 0 : index
    %c0_15 = arith.constant 0 : index
    %41 = vector.load %arg2[%c0_14, %c0_15] : memref<128x896xbf16, #tpu.memory_space<vmem>>, vector<128x896xbf16>
    %cst_16 = arith.constant dense<0.000000e+00> : vector<16x896xf32>
    %42 = tpu.matmul %40, %41, %cst_16 {dimension_numbers = #tpu.dot_dimension_numbers<[1], [0], [0], [1], [0, 0, 1, 1], [], []>} : vector<16x128xbf16>, vector<128x896xbf16>, vector<16x896xf32> -> vector<16x896xf32>
    %43 = vector.extract_strided_slice %42 {offsets = [0, 768], sizes = [16, 128], strides = [1, 1]} : vector<16x896xf32> to vector<16x128xf32>
    %44 = vector.extract_strided_slice %42 {offsets = [0, 0], sizes = [16, 384], strides = [1, 1]} : vector<16x896xf32> to vector<16x384xf32>
    %45 = vector.extract_strided_slice %42 {offsets = [0, 384], sizes = [16, 384], strides = [1, 1]} : vector<16x896xf32> to vector<16x384xf32>
    %46 = tpu.concatenate %44, %45 in 0 : vector<16x384xf32>, vector<16x384xf32> -> vector<32x384xf32>
    %47 = arith.truncf %46 : vector<32x384xf32> to vector<32x384xbf16>
    %c0_17 = arith.constant 0 : index
    %c0_18 = arith.constant 0 : index
    %48 = vector.load %arg0[%c0_17, %c0_18] : memref<16x32xbf16, #tpu.memory_space<vmem>>, vector<16x32xbf16>
    %cst_19 = arith.constant dense<0.000000e+00> : vector<16x384xf32>
    %49 = tpu.matmul %48, %47, %cst_19 {dimension_numbers = #tpu.dot_dimension_numbers<[1], [0], [0], [1], [0, 0, 1, 1], [], []>} : vector<16x32xbf16>, vector<32x384xbf16>, vector<16x384xf32> -> vector<16x384xf32>
    %c0_20 = arith.constant 0 : index
    %c0_21 = arith.constant 0 : index
    %50 = vector.load %arg3[%c0_20, %c0_21] : memref<1x384xf32, #tpu.memory_space<vmem>>, vector<1x384xf32>
    %51 = vector.broadcast %50 : vector<1x384xf32> to vector<16x384xf32>
    %52 = arith.addf %49, %51 : vector<16x384xf32>
    %53 = vector.extract_strided_slice %52 {offsets = [0, 0], sizes = [16, 128], strides = [1, 1]} : vector<16x384xf32> to vector<16x128xf32>
    %54 = arith.addf %53, %43 : vector<16x128xf32>
    %55 = arith.negf %54 : vector<16x128xf32>
    %56 = math.exp %55 : vector<16x128xf32>
    %cst_22 = arith.constant 1.000000e+00 : f32
    %57 = vector.broadcast %cst_22 : f32 to vector<16x128xf32>
    %58 = arith.addf %57, %56 : vector<16x128xf32>
    %59 = arith.divf %57, %58 : vector<16x128xf32>
    %60 = vector.extract_strided_slice %52 {offsets = [0, 128], sizes = [16, 128], strides = [1, 1]} : vector<16x384xf32> to vector<16x128xf32>
    %61 = arith.addf %60, %43 : vector<16x128xf32>
    %62 = arith.negf %61 : vector<16x128xf32>
    %63 = math.exp %62 : vector<16x128xf32>
    %cst_23 = arith.constant 1.000000e+00 : f32
    %64 = vector.broadcast %cst_23 : f32 to vector<16x128xf32>
    %65 = arith.addf %64, %63 : vector<16x128xf32>
    %66 = arith.divf %64, %65 : vector<16x128xf32>
    %67 = vector.extract_strided_slice %52 {offsets = [0, 256], sizes = [16, 128], strides = [1, 1]} : vector<16x384xf32> to vector<16x128xf32>
    %68 = arith.mulf %66, %39 : vector<16x128xf32>
    %69 = arith.truncf %68 : vector<16x128xf32> to vector<16x128xbf16>
    %c0_24 = arith.constant 0 : index
    %c0_25 = arith.constant 0 : index
    %70 = vector.load %arg4[%c0_24, %c0_25] : memref<128x128xbf16, #tpu.memory_space<vmem>>, vector<128x128xbf16>
    %cst_26 = arith.constant dense<0.000000e+00> : vector<16x128xf32>
    %71 = tpu.matmul %69, %70, %cst_26 {dimension_numbers = #tpu.dot_dimension_numbers<[1], [0], [0], [1], [0, 0, 1, 1], [], []>} : vector<16x128xbf16>, vector<128x128xbf16>, vector<16x128xf32> -> vector<16x128xf32>
    %72 = arith.addf %67, %71 : vector<16x128xf32>
    %73 = math.tanh %72 : vector<16x128xf32>
    %cst_27 = arith.constant 1.000000e+00 : f32
    %74 = vector.broadcast %cst_27 : f32 to vector<16x128xf32>
    %75 = arith.subf %74, %59 : vector<16x128xf32>
    %76 = arith.mulf %75, %39 : vector<16x128xf32>
    %77 = arith.mulf %59, %73 : vector<16x128xf32>
    %78 = arith.addf %76, %77 : vector<16x128xf32>
    %79 = arith.truncf %78 : vector<16x128xf32> to vector<16x128xbf16>
    %c0_28 = arith.constant 0 : index
    %c0_29 = arith.constant 0 : index
    %80 = vector.load %arg2[%c0_28, %c0_29] : memref<128x896xbf16, #tpu.memory_space<vmem>>, vector<128x896xbf16>
    %cst_30 = arith.constant dense<0.000000e+00> : vector<16x896xf32>
    %81 = tpu.matmul %79, %80, %cst_30 {dimension_numbers = #tpu.dot_dimension_numbers<[1], [0], [0], [1], [0, 0, 1, 1], [], []>} : vector<16x128xbf16>, vector<128x896xbf16>, vector<16x896xf32> -> vector<16x896xf32>
    %82 = vector.extract_strided_slice %81 {offsets = [0, 768], sizes = [16, 128], strides = [1, 1]} : vector<16x896xf32> to vector<16x128xf32>
    %83 = vector.extract_strided_slice %81 {offsets = [0, 0], sizes = [16, 384], strides = [1, 1]} : vector<16x896xf32> to vector<16x384xf32>
    %84 = vector.extract_strided_slice %81 {offsets = [0, 384], sizes = [16, 384], strides = [1, 1]} : vector<16x896xf32> to vector<16x384xf32>
    %85 = tpu.concatenate %83, %84 in 0 : vector<16x384xf32>, vector<16x384xf32> -> vector<32x384xf32>
    %86 = arith.truncf %85 : vector<32x384xf32> to vector<32x384xbf16>
    %c0_31 = arith.constant 0 : index
    %c0_32 = arith.constant 0 : index
    %87 = vector.load %arg0[%c0_31, %c0_32] : memref<16x32xbf16, #tpu.memory_space<vmem>>, vector<16x32xbf16>
    %cst_33 = arith.constant dense<0.000000e+00> : vector<16x384xf32>
    %88 = tpu.matmul %87, %86, %cst_33 {dimension_numbers = #tpu.dot_dimension_numbers<[1], [0], [0], [1], [0, 0, 1, 1], [], []>} : vector<16x32xbf16>, vector<32x384xbf16>, vector<16x384xf32> -> vector<16x384xf32>
    %c0_34 = arith.constant 0 : index
    %c0_35 = arith.constant 0 : index
    %89 = vector.load %arg3[%c0_34, %c0_35] : memref<1x384xf32, #tpu.memory_space<vmem>>, vector<1x384xf32>
    %90 = vector.broadcast %89 : vector<1x384xf32> to vector<16x384xf32>
    %91 = arith.addf %88, %90 : vector<16x384xf32>
    %92 = vector.extract_strided_slice %91 {offsets = [0, 0], sizes = [16, 128], strides = [1, 1]} : vector<16x384xf32> to vector<16x128xf32>
    %93 = arith.addf %92, %82 : vector<16x128xf32>
    %94 = arith.negf %93 : vector<16x128xf32>
    %95 = math.exp %94 : vector<16x128xf32>
    %cst_36 = arith.constant 1.000000e+00 : f32
    %96 = vector.broadcast %cst_36 : f32 to vector<16x128xf32>
    %97 = arith.addf %96, %95 : vector<16x128xf32>
    %98 = arith.divf %96, %97 : vector<16x128xf32>
    %99 = vector.extract_strided_slice %91 {offsets = [0, 128], sizes = [16, 128], strides = [1, 1]} : vector<16x384xf32> to vector<16x128xf32>
    %100 = arith.addf %99, %82 : vector<16x128xf32>
    %101 = arith.negf %100 : vector<16x128xf32>
    %102 = math.exp %101 : vector<16x128xf32>
    %cst_37 = arith.constant 1.000000e+00 : f32
    %103 = vector.broadcast %cst_37 : f32 to vector<16x128xf32>
    %104 = arith.addf %103, %102 : vector<16x128xf32>
    %105 = arith.divf %103, %104 : vector<16x128xf32>
    %106 = vector.extract_strided_slice %91 {offsets = [0, 256], sizes = [16, 128], strides = [1, 1]} : vector<16x384xf32> to vector<16x128xf32>
    %107 = arith.mulf %105, %78 : vector<16x128xf32>
    %108 = arith.truncf %107 : vector<16x128xf32> to vector<16x128xbf16>
    %c0_38 = arith.constant 0 : index
    %c0_39 = arith.constant 0 : index
    %109 = vector.load %arg4[%c0_38, %c0_39] : memref<128x128xbf16, #tpu.memory_space<vmem>>, vector<128x128xbf16>
    %cst_40 = arith.constant dense<0.000000e+00> : vector<16x128xf32>
    %110 = tpu.matmul %108, %109, %cst_40 {dimension_numbers = #tpu.dot_dimension_numbers<[1], [0], [0], [1], [0, 0, 1, 1], [], []>} : vector<16x128xbf16>, vector<128x128xbf16>, vector<16x128xf32> -> vector<16x128xf32>
    %111 = arith.addf %106, %110 : vector<16x128xf32>
    %112 = math.tanh %111 : vector<16x128xf32>
    %cst_41 = arith.constant 1.000000e+00 : f32
    %113 = vector.broadcast %cst_41 : f32 to vector<16x128xf32>
    %114 = arith.subf %113, %98 : vector<16x128xf32>
    %115 = arith.mulf %114, %78 : vector<16x128xf32>
    %116 = arith.mulf %98, %112 : vector<16x128xf32>
    %117 = arith.addf %115, %116 : vector<16x128xf32>
    %c0_42 = arith.constant 0 : index
    %c0_43 = arith.constant 0 : index
    %118 = vector.load %arg5[%c0_42, %c0_43] : memref<16x128xf32, #tpu.memory_space<vmem>>, vector<16x128xf32>
    tpu.vector_store %arg5[%c0_42, %c0_43], %117 {strides = array<i32>} : memref<16x128xf32, #tpu.memory_space<vmem>>, vector<16x128xf32>,
    return
  }
}

</mosaic_0001>

<llo_original>
// kernel: ggnn_forward.1
$region0: #{ggnn_forward.1}
  #allocation0 [shape = 'u32[]', space=smem, size = 0x4, offset = 0x4, fixed_abs, tag = 'smem constant byte address 0x4 - core index']
  #allocation1 [shape = 'u32[144,128]{1,0:T(1,128)}', space=vmem, size = 0x12000, scoped, tag = 'internal scratch']
  %s0 = inlined_call_operand.vmem [shape: bf16[16,32], index: 0, kind: input, shape index: {}]
  %s1 = inlined_call_operand.vmem [shape: f32[16,128], index: 1, kind: input, shape index: {}]
  %s2 = inlined_call_operand.vmem [shape: bf16[128,896], index: 2, kind: input, shape index: {}]
  %s3 = inlined_call_operand.vmem [shape: f32[1,384], index: 3, kind: input, shape index: {}]
  %s4 = inlined_call_operand.vmem [shape: bf16[128,128], index: 4, kind: input, shape index: {}]
  %s5 = inlined_call_operand.vmem [shape: f32[16,128], index: 5, kind: output, shape index: {}]
  %s6 = sld [smem:[#allocation0]]
  $region30: #{ggnn_forward.1} parent=0
    _
  %s8 = ssub.s32 1, %s6
  %s9 = scalar_select 0, %s8, %s6
  // Predicated region
  $region2: #{ggnn_forward.1} parent=0 // pred_check
    _
  $region3: #{ggnn_forward.1} parent=0 // pred_check_branch
    %11 = sbr.rel (0) target = $region5
  $region4: #{ggnn_forward.1} parent=0 // pred_region
    _
  $region5: #{ggnn_forward.1} parent=0 // pred_fallthru
    _
  // Predicated region
  $region6: #{ggnn_forward.1} parent=0 // pred_check
    _
  $region7: #{ggnn_forward.1} parent=0 // pred_check_branch
    %13 = sbr.rel (0) target = $region9
  $region8: #{ggnn_forward.1} parent=0 // pred_region
    _
  $region9: #{ggnn_forward.1} parent=0 // pred_fallthru
    _
  // Predicated region
  $region10: #{ggnn_forward.1} parent=0 // pred_check
    _
  $region11: #{ggnn_forward.1} parent=0 // pred_check_branch
    %15 = sbr.rel (0) target = $region13
  $region12: #{ggnn_forward.1} parent=0 // pred_region
    _
  $region13: #{ggnn_forward.1} parent=0 // pred_fallthru
    _
  // Predicated region
  $region14: #{ggnn_forward.1} parent=0 // pred_check
    _
  $region15: #{ggnn_forward.1} parent=0 // pred_check_branch
    %17 = sbr.rel (0) target = $region17
  $region16: #{ggnn_forward.1} parent=0 // pred_region
    _
  $region17: #{ggnn_forward.1} parent=0 // pred_fallthru
    _
  // Predicated region
  $region18: #{ggnn_forward.1} parent=0 // pred_check
    _
  $region19: #{ggnn_forward.1} parent=0 // pred_check_branch
    %19 = sbr.rel (0) target = $region21
  $region20: #{ggnn_forward.1} parent=0 // pred_region
    _
  $region21: #{ggnn_forward.1} parent=0 // pred_fallthru
    _
  %v21 = vld [vmem:[%s1] sm:$0xff]
  %v22 = vld [vmem:[%s1 + $0x8] sm:$0xff]
  %v23 = vpack.c.bf16 %v22, %v21
  %v24 = vld [vmem:[%s2] sm:$0xff]
  %v25 = vld [vmem:[%s2 + $0x8] sm:$0xff]
  %v26 = vld [vmem:[%s2 + $0x10] sm:$0xff]
  %v27 = vld [vmem:[%s2 + $0x18] sm:$0xf]
  %v28 = vld [vmem:[%s2 + $0x1c] sm:$0xff]
  %v29 = vld [vmem:[%s2 + $0x24] sm:$0xff]
  %v30 = vld [vmem:[%s2 + $0x2c] sm:$0xff]
  %v31 = vld [vmem:[%s2 + $0x34] sm:$0xf]
  %v32 = vld [vmem:[%s2 + $0x38] sm:$0xff]
  %v33 = vld [vmem:[%s2 + $0x40] sm:$0xff]
  %v34 = vld [vmem:[%s2 + $0x48] sm:$0xff]
  %v35 = vld [vmem:[%s2 + $0x50] sm:$0xf]
  %v36 = vld [vmem:[%s2 + $0x54] sm:$0xff]
  %v37 = vld [vmem:[%s2 + $0x5c] sm:$0xff]
  %v38 = vld [vmem:[%s2 + $0x64] sm:$0xff]
  %v39 = vld [vmem:[%s2 + $0x6c] sm:$0xf]
  %v40 = vld [vmem:[%s2 + $0x70] sm:$0xff]
  %v41 = vld [vmem:[%s2 + $0x78] sm:$0xff]
  %v42 = vld [vmem:[%s2 + $0x80] sm:$0xff]
  %v43 = vld [vmem:[%s2 + $0x88] sm:$0xf]
  %v44 = vld [vmem:[%s2 + $0x8c] sm:$0xff]
  %v45 = vld [vmem:[%s2 + $0x94] sm:$0xff]
  %v46 = vld [vmem:[%s2 + $0x9c] sm:$0xff]
  %v47 = vld [vmem:[%s2 + $0xa4] sm:$0xf]
  %v48 = vld [vmem:[%s2 + $0xa8] sm:$0xff]
  %v49 = vld [vmem:[%s2 + $0xb0] sm:$0xff]
  %v50 = vld [vmem:[%s2 + $0xb8] sm:$0xff]
  %v51 = vld [vmem:[%s2 + $0xc0] sm:$0xf]
  %v52 = vld [vmem:[%s2 + $0xc4] sm:$0xff]
  %v53 = vld [vmem:[%s2 + $0xcc] sm:$0xff]
  %v54 = vld [vmem:[%s2 + $0xd4] sm:$0xff]
  %v55 = vld [vmem:[%s2 + $0xdc] sm:$0xf]
  %v56 = vld [vmem:[%s2 + $0xe0] sm:$0xff]
  %v57 = vld [vmem:[%s2 + $0xe8] sm:$0xff]
  %v58 = vld [vmem:[%s2 + $0xf0] sm:$0xff]
  %v59 = vld [vmem:[%s2 + $0xf8] sm:$0xf]
  %v60 = vld [vmem:[%s2 + $0xfc] sm:$0xff]
  %v61 = vld [vmem:[%s2 + $0x104] sm:$0xff]
  %v62 = vld [vmem:[%s2 + $0x10c] sm:$0xff]
  %v63 = vld [vmem:[%s2 + $0x114] sm:$0xf]
  %v64 = vld [vmem:[%s2 + $0x118] sm:$0xff]
  %v65 = vld [vmem:[%s2 + $0x120] sm:$0xff]
  %v66 = vld [vmem:[%s2 + $0x128] sm:$0xff]
  %v67 = vld [vmem:[%s2 + $0x130] sm:$0xf]
  %v68 = vld [vmem:[%s2 + $0x134] sm:$0xff]
  %v69 = vld [vmem:[%s2 + $0x13c] sm:$0xff]
  %v70 = vld [vmem:[%s2 + $0x144] sm:$0xff]
  %v71 = vld [vmem:[%s2 + $0x14c] sm:$0xf]
  %v72 = vld [vmem:[%s2 + $0x150] sm:$0xff]
  %v73 = vld [vmem:[%s2 + $0x158] sm:$0xff]
  %v74 = vld [vmem:[%s2 + $0x160] sm:$0xff]
  %v75 = vld [vmem:[%s2 + $0x168] sm:$0xf]
  %v76 = vld [vmem:[%s2 + $0x16c] sm:$0xff]
  %v77 = vld [vmem:[%s2 + $0x174] sm:$0xff]
  %v78 = vld [vmem:[%s2 + $0x17c] sm:$0xff]
  %v79 = vld [vmem:[%s2 + $0x184] sm:$0xf]
  %v80 = vld [vmem:[%s2 + $0x188] sm:$0xff]
  %v81 = vld [vmem:[%s2 + $0x190] sm:$0xff]
  %v82 = vld [vmem:[%s2 + $0x198] sm:$0xff]
  %v83 = vld [vmem:[%s2 + $0x1a0] sm:$0xf]
  %v84 = vld [vmem:[%s2 + $0x1a4] sm:$0xff]
  %v85 = vld [vmem:[%s2 + $0x1ac] sm:$0xff]
  %v86 = vld [vmem:[%s2 + $0x1b4] sm:$0xff]
  %v87 = vld [vmem:[%s2 + $0x1bc] sm:$0xf]
  %v152 = vunpack.c.l.b16 %v24
  %v153 = vunpack.c.h.b16 %v24
  %v154 = vunpack.c.l.b16 %v25
  %v155 = vunpack.c.h.b16 %v25
  %v156 = vunpack.c.l.b16 %v26
  %v157 = vunpack.c.h.b16 %v26
  %v158 = vunpack.c.l.b16 %v27
  %v159 = vunpack.c.l.b16 %v28
  %v160 = vunpack.c.h.b16 %v28
  %v161 = vunpack.c.l.b16 %v29
  %v162 = vunpack.c.h.b16 %v29
  %v163 = vunpack.c.l.b16 %v30
  %v164 = vunpack.c.h.b16 %v30
  %v165 = vunpack.c.l.b16 %v31
  %v166 = vunpack.c.l.b16 %v32
  %v167 = vunpack.c.h.b16 %v32
  %v168 = vunpack.c.l.b16 %v33
  %v169 = vunpack.c.h.b16 %v33
  %v170 = vunpack.c.l.b16 %v34
  %v171 = vunpack.c.h.b16 %v34
  %v172 = vunpack.c.l.b16 %v35
  %v173 = vunpack.c.l.b16 %v36
  %v174 = vunpack.c.h.b16 %v36
  %v175 = vunpack.c.l.b16 %v37
  %v176 = vunpack.c.h.b16 %v37
  %v177 = vunpack.c.l.b16 %v38
  %v178 = vunpack.c.h.b16 %v38
  %v179 = vunpack.c.l.b16 %v39
  %v180 = vunpack.c.l.b16 %v40
  %v181 = vunpack.c.h.b16 %v40
  %v182 = vunpack.c.l.b16 %v41
  %v183 = vunpack.c.h.b16 %v41
  %v184 = vunpack.c.l.b16 %v42
  %v185 = vunpack.c.h.b16 %v42
  %v186 = vunpack.c.l.b16 %v43
  %v187 = vunpack.c.l.b16 %v44
  %v188 = vunpack.c.h.b16 %v44
  %v189 = vunpack.c.l.b16 %v45
  %v190 = vunpack.c.h.b16 %v45
  %v191 = vunpack.c.l.b16 %v46
  %v192 = vunpack.c.h.b16 %v46
  %v193 = vunpack.c.l.b16 %v47
  %v194 = vunpack.c.l.b16 %v48
  %v195 = vunpack.c.h.b16 %v48
  %v196 = vunpack.c.l.b16 %v49
  %v197 = vunpack.c.h.b16 %v49
  %v198 = vunpack.c.l.b16 %v50
  %v199 = vunpack.c.h.b16 %v50
  %v200 = vunpack.c.l.b16 %v51
  %v201 = vunpack.c.l.b16 %v52
  %v202 = vunpack.c.h.b16 %v52
  %v203 = vunpack.c.l.b16 %v53
  %v204 = vunpack.c.h.b16 %v53
  %v205 = vunpack.c.l.b16 %v54
  %v206 = vunpack.c.h.b16 %v54
  %v207 = vunpack.c.l.b16 %v55
  %v208 = vunpack.c.l.b16 %v56
  %v209 = vunpack.c.h.b16 %v56
  %v210 = vunpack.c.l.b16 %v57
  %v211 = vunpack.c.h.b16 %v57
  %v212 = vunpack.c.l.b16 %v58
  %v213 = vunpack.c.h.b16 %v58
  %v214 = vunpack.c.l.b16 %v59
  %v215 = vunpack.c.l.b16 %v60
  %v216 = vunpack.c.h.b16 %v60
  %v217 = vunpack.c.l.b16 %v61
  %v218 = vunpack.c.h.b16 %v61
  %v219 = vunpack.c.l.b16 %v62
  %v220 = vunpack.c.h.b16 %v62
  %v221 = vunpack.c.l.b16 %v63
  %v222 = vunpack.c.l.b16 %v64
  %v223 = vunpack.c.h.b16 %v64
  %v224 = vunpack.c.l.b16 %v65
  %v225 = vunpack.c.h.b16 %v65
  %v226 = vunpack.c.l.b16 %v66
  %v227 = vunpack.c.h.b16 %v66
  %v228 = vunpack.c.l.b16 %v67
  %v229 = vunpack.c.l.b16 %v68
  %v230 = vunpack.c.h.b16 %v68
  %v231 = vunpack.c.l.b16 %v69
  %v232 = vunpack.c.h.b16 %v69
  %v233 = vunpack.c.l.b16 %v70
  %v234 = vunpack.c.h.b16 %v70
  %v235 = vunpack.c.l.b16 %v71
  %v236 = vunpack.c.l.b16 %v72
  %v237 = vunpack.c.h.b16 %v72
  %v238 = vunpack.c.l.b16 %v73
  %v239 = vunpack.c.h.b16 %v73
  %v240 = vunpack.c.l.b16 %v74
  %v241 = vunpack.c.h.b16 %v74
  %v242 = vunpack.c.l.b16 %v75
  %v243 = vunpack.c.l.b16 %v76
  %v244 = vunpack.c.h.b16 %v76
  %v245 = vunpack.c.l.b16 %v77
  %v246 = vunpack.c.h.b16 %v77
  %v247 = vunpack.c.l.b16 %v78
  %v248 = vunpack.c.h.b16 %v78
  %v249 = vunpack.c.l.b16 %v79
  %v250 = vunpack.c.l.b16 %v80
  %v251 = vunpack.c.h.b16 %v80
  %v252 = vunpack.c.l.b16 %v81
  %v253 = vunpack.c.h.b16 %v81
  %v254 = vunpack.c.l.b16 %v82
  %v255 = vunpack.c.h.b16 %v82
  %v256 = vunpack.c.l.b16 %v83
  %v257 = vunpack.c.l.b16 %v84
  %v258 = vunpack.c.h.b16 %v84
  %v259 = vunpack.c.l.b16 %v85
  %v260 = vunpack.c.h.b16 %v85
  %v261 = vunpack.c.l.b16 %v86
  %v262 = vunpack.c.h.b16 %v86
  %v263 = vunpack.c.l.b16 %v87
  %v264 = vpack.c.b16 %v159, %v152
  %v265 = vpack.c.b16 %v160, %v153
  %v266 = vpack.c.b16 %v161, %v154
  %v267 = vpack.c.b16 %v162, %v155
  %v268 = vpack.c.b16 %v163, %v156
  %v269 = vpack.c.b16 %v164, %v157
  %v270 = vpack.c.b16 %v165, %v158
  %v271 = vpack.c.b16 %v173, %v166
  %v272 = vpack.c.b16 %v174, %v167
  %v273 = vpack.c.b16 %v175, %v168
  %v274 = vpack.c.b16 %v176, %v169
  %v275 = vpack.c.b16 %v177, %v170
  %v276 = vpack.c.b16 %v178, %v171
  %v277 = vpack.c.b16 %v179, %v172
  %v278 = vpack.c.b16 %v187, %v180
  %v279 = vpack.c.b16 %v188, %v181
  %v280 = vpack.c.b16 %v189, %v182
  %v281 = vpack.c.b16 %v190, %v183
  %v282 = vpack.c.b16 %v191, %v184
  %v283 = vpack.c.b16 %v192, %v185
  %v284 = vpack.c.b16 %v193, %v186
  %v285 = vpack.c.b16 %v201, %v194
  %v286 = vpack.c.b16 %v202, %v195
  %v287 = vpack.c.b16 %v203, %v196
  %v288 = vpack.c.b16 %v204, %v197
  %v289 = vpack.c.b16 %v205, %v198
  %v290 = vpack.c.b16 %v206, %v199
  %v291 = vpack.c.b16 %v207, %v200
  %v292 = vpack.c.b16 %v215, %v208
  %v293 = vpack.c.b16 %v216, %v209
  %v294 = vpack.c.b16 %v217, %v210
  %v295 = vpack.c.b16 %v218, %v211
  %v296 = vpack.c.b16 %v219, %v212
  %v297 = vpack.c.b16 %v220, %v213
  %v298 = vpack.c.b16 %v221, %v214
  %v299 = vpack.c.b16 %v229, %v222
  %v300 = vpack.c.b16 %v230, %v223
  %v301 = vpack.c.b16 %v231, %v224
  %v302 = vpack.c.b16 %v232, %v225
  %v303 = vpack.c.b16 %v233, %v226
  %v304 = vpack.c.b16 %v234, %v227
  %v305 = vpack.c.b16 %v235, %v228
  %v306 = vpack.c.b16 %v243, %v236
  %v307 = vpack.c.b16 %v244, %v237
  %v308 = vpack.c.b16 %v245, %v238
  %v309 = vpack.c.b16 %v246, %v239
  %v310 = vpack.c.b16 %v247, %v240
  %v311 = vpack.c.b16 %v248, %v241
  %v312 = vpack.c.b16 %v249, %v242
  %v313 = vpack.c.b16 %v257, %v250
  %v314 = vpack.c.b16 %v258, %v251
  %v315 = vpack.c.b16 %v259, %v252
  %v316 = vpack.c.b16 %v260, %v253
  %v317 = vpack.c.b16 %v261, %v254
  %v318 = vpack.c.b16 %v262, %v255
  %v319 = vpack.c.b16 %v263, %v256
  %376 = vmatprep.subr.bf16.mxu0 %v265
  %377 = vmatpush1.bf16.msra.mxu0 %v264
  %378 = vmatprep.subr.bf16.mxu0 %v272
  %379 = vmatpush1.bf16.msra.mxu0 %v271
  %380 = vmatprep.subr.bf16.mxu0 %v279
  %381 = vmatpush1.bf16.msra.mxu0 %v278
  %382 = vmatprep.subr.bf16.mxu0 %v286
  %383 = vmatpush1.bf16.msra.mxu0 %v285
  %384 = vmatprep.subr.bf16.mxu0 %v293
  %385 = vmatpush1.bf16.msra.mxu0 %v292
  %386 = vmatprep.subr.bf16.mxu0 %v300
  %387 = vmatpush1.bf16.msra.mxu0 %v299
  %388 = vmatprep.subr.bf16.mxu0 %v307
  %389 = vmatpush1.bf16.msra.mxu0 %v306
  %390 = vmatprep.subr.bf16.mxu0 %v314
  %391 = vmatpush1.bf16.msra.mxu0 %v313
  %392 = vmatprep.subr.bf16.mxu0 0
  %393 = vmatpush1.bf16.msra.mxu0 0
  %394 = vmatprep.subr.bf16.mxu0 0
  %395 = vmatpush1.bf16.msra.mxu0 0
  %396 = vmatprep.subr.bf16.mxu0 0
  %397 = vmatpush1.bf16.msra.mxu0 0
  %398 = vmatprep.subr.bf16.mxu0 0
  %399 = vmatpush1.bf16.msra.mxu0 0
  %400 = vmatprep.subr.bf16.mxu0 0
  %401 = vmatpush1.bf16.msra.mxu0 0
  %402 = vmatprep.subr.bf16.mxu0 0
  %403 = vmatpush1.bf16.msra.mxu0 0
  %404 = vmatprep.subr.bf16.mxu0 0
  %405 = vmatpush1.bf16.msra.mxu0 0
  %406 = vmatprep.subr.bf16.mxu0 0
  %407 = vmatpush1.bf16.msra.mxu0 0
  %408 = vmatprep.mubr.bf16.mxu0 0
  %409 = vmatmul.mubr.bf16.gmra.mrb[0].mxu0 %v23
  %v410 = vpop.f32.mrb[0].mxu0
  %v411 = vadd.f32 0.0, %v410
  %v412 = vpop.f32.mrb[0].mxu0
  %v413 = vadd.f32 0.0, %v412
  %v414 = vpop.f32.mrb[0].mxu0
  %v415 = vadd.f32 0.0, %v414
  %v416 = vpop.f32.mrb[0].mxu0
  %v417 = vadd.f32 0.0, %v416
  %418 = vdwg.mxu0
  %419 = vmatprep.subr.bf16.mxu0 %v267
  %420 = vmatpush1.bf16.msra.mxu0 %v266
  %421 = vmatprep.subr.bf16.mxu0 %v274
  %422 = vmatpush1.bf16.msra.mxu0 %v273
  %423 = vmatprep.subr.bf16.mxu0 %v281
  %424 = vmatpush1.bf16.msra.mxu0 %v280
  %425 = vmatprep.subr.bf16.mxu0 %v288
  %426 = vmatpush1.bf16.msra.mxu0 %v287
  %427 = vmatprep.subr.bf16.mxu0 %v295
  %428 = vmatpush1.bf16.msra.mxu0 %v294
  %429 = vmatprep.subr.bf16.mxu0 %v302
  %430 = vmatpush1.bf16.msra.mxu0 %v301
  %431 = vmatprep.subr.bf16.mxu0 %v309
  %432 = vmatpush1.bf16.msra.mxu0 %v308
  %433 = vmatprep.subr.bf16.mxu0 %v316
  %434 = vmatpush1.bf16.msra.mxu0 %v315
  %435 = vmatprep.subr.bf16.mxu0 0
  %436 = vmatpush1.bf16.msra.mxu0 0
  %437 = vmatprep.subr.bf16.mxu0 0
  %438 = vmatpush1.bf16.msra.mxu0 0
  %439 = vmatprep.subr.bf16.mxu0 0
  %440 = vmatpush1.bf16.msra.mxu0 0
  %441 = vmatprep.subr.bf16.mxu0 0
  %442 = vmatpush1.bf16.msra.mxu0 0
  %443 = vmatprep.subr.bf16.mxu0 0
  %444 = vmatpush1.bf16.msra.mxu0 0
  %445 = vmatprep.subr.bf16.mxu0 0
  %446 = vmatpush1.bf16.msra.mxu0 0
  %447 = vmatprep.subr.bf16.mxu0 0
  %448 = vmatpush1.bf16.msra.mxu0 0
  %449 = vmatprep.subr.bf16.mxu0 0
  %450 = vmatpush1.bf16.msra.mxu0 0
  %451 = vmatprep.mubr.bf16.mxu0 0
  %452 = vmatmul.mubr.bf16.gmra.mrb[0].mxu0 %v23
  %v453 = vpop.f32.mrb[0].mxu0
  %v454 = vadd.f32 0.0, %v453
  %v455 = vpop.f32.mrb[0].mxu0
  %v456 = vadd.f32 0.0, %v455
  %v457 = vpop.f32.mrb[0].mxu0
  %v458 = vadd.f32 0.0, %v457
  %v459 = vpop.f32.mrb[0].mxu0
  %v460 = vadd.f32 0.0, %v459
  %461 = vdwg.mxu0
  %462 = vmatprep.subr.bf16.mxu0 %v269
  %463 = vmatpush1.bf16.msra.mxu0 %v268
  %464 = vmatprep.subr.bf16.mxu0 %v276
  %465 = vmatpush1.bf16.msra.mxu0 %v275
  %466 = vmatprep.subr.bf16.mxu0 %v283
  %467 = vmatpush1.bf16.msra.mxu0 %v282
  %468 = vmatprep.subr.bf16.mxu0 %v290
  %469 = vmatpush1.bf16.msra.mxu0 %v289
  %470 = vmatprep.subr.bf16.mxu0 %v297
  %471 = vmatpush1.bf16.msra.mxu0 %v296
  %472 = vmatprep.subr.bf16.mxu0 %v304
  %473 = vmatpush1.bf16.msra.mxu0 %v303
  %474 = vmatprep.subr.bf16.mxu0 %v311
  %475 = vmatpush1.bf16.msra.mxu0 %v310
  %476 = vmatprep.subr.bf16.mxu0 %v318
  %477 = vmatpush1.bf16.msra.mxu0 %v317
  %478 = vmatprep.subr.bf16.mxu0 0
  %479 = vmatpush1.bf16.msra.mxu0 0
  %480 = vmatprep.subr.bf16.mxu0 0
  %481 = vmatpush1.bf16.msra.mxu0 0
  %482 = vmatprep.subr.bf16.mxu0 0
  %483 = vmatpush1.bf16.msra.mxu0 0
  %484 = vmatprep.subr.bf16.mxu0 0
  %485 = vmatpush1.bf16.msra.mxu0 0
  %486 = vmatprep.subr.bf16.mxu0 0
  %487 = vmatpush1.bf16.msra.mxu0 0
  %488 = vmatprep.subr.bf16.mxu0 0
  %489 = vmatpush1.bf16.msra.mxu0 0
  %490 = vmatprep.subr.bf16.mxu0 0
  %491 = vmatpush1.bf16.msra.mxu0 0
  %492 = vmatprep.subr.bf16.mxu0 0
  %493 = vmatpush1.bf16.msra.mxu0 0
  %494 = vmatprep.mubr.bf16.mxu0 0
  %495 = vmatmul.mubr.bf16.gmra.mrb[0].mxu0 %v23
  %v496 = vpop.f32.mrb[0].mxu0
  %v497 = vadd.f32 0.0, %v496
  %v498 = vpop.f32.mrb[0].mxu0
  %v499 = vadd.f32 0.0, %v498
  %v500 = vpop.f32.mrb[0].mxu0
  %v501 = vadd.f32 0.0, %v500
  %v502 = vpop.f32.mrb[0].mxu0
  %v503 = vadd.f32 0.0, %v502
  %504 = vdwg.mxu0
  %505 = vmatprep.subr.bf16.mxu0 0
  %506 = vmatpush1.bf16.msra.mxu0 %v270
  %507 = vmatprep.subr.bf16.mxu0 0
  %508 = vmatpush1.bf16.msra.mxu0 %v277
  %509 = vmatprep.subr.bf16.mxu0 0
  %510 = vmatpush1.bf16.msra.mxu0 %v284
  %511 = vmatprep.subr.bf16.mxu0 0
  %512 = vmatpush1.bf16.msra.mxu0 %v291
  %513 = vmatprep.subr.bf16.mxu0 0
  %514 = vmatpush1.bf16.msra.mxu0 %v298
  %515 = vmatprep.subr.bf16.mxu0 0
  %516 = vmatpush1.bf16.msra.mxu0 %v305
  %517 = vmatprep.subr.bf16.mxu0 0
  %518 = vmatpush1.bf16.msra.mxu0 %v312
  %519 = vmatprep.subr.bf16.mxu0 0
  %520 = vmatpush1.bf16.msra.mxu0 %v319
  %521 = vmatprep.subr.bf16.mxu0 0
  %522 = vmatpush1.bf16.msra.mxu0 0
  %523 = vmatprep.subr.bf16.mxu0 0
  %524 = vmatpush1.bf16.msra.mxu0 0
  %525 = vmatprep.subr.bf16.mxu0 0
  %526 = vmatpush1.bf16.msra.mxu0 0
  %527 = vmatprep.subr.bf16.mxu0 0
  %528 = vmatpush1.bf16.msra.mxu0 0
  %529 = vmatprep.subr.bf16.mxu0 0
  %530 = vmatpush1.bf16.msra.mxu0 0
  %531 = vmatprep.subr.bf16.mxu0 0
  %532 = vmatpush1.bf16.msra.mxu0 0
  %533 = vmatprep.subr.bf16.mxu0 0
  %534 = vmatpush1.bf16.msra.mxu0 0
  %535 = vmatprep.subr.bf16.mxu0 0
  %536 = vmatpush1.bf16.msra.mxu0 0
  %537 = vmatprep.mubr.bf16.mxu0 0
  %538 = vmatmul.mubr.bf16.gmra.mrb[0].mxu0 %v23
  %v539 = vpop.f32.mrb[0].mxu0
  %v540 = vadd.f32 0.0, %v539
  %v541 = vpop.f32.mrb[0].mxu0
  %v542 = vpop.f32.mrb[0].mxu0
  %v543 = vadd.f32 0.0, %v542
  %v544 = vpop.f32.mrb[0].mxu0
  %545 = vdwg.mxu0
  %v546 = vpack.c.bf16 %v415, %v411
  %v547 = vpack.c.bf16 %v417, %v413
  %v548 = vpack.c.bf16 %v458, %v454
  %v549 = vpack.c.bf16 %v460, %v456
  %v550 = vpack.c.bf16 %v501, %v497
  %v551 = vpack.c.bf16 %v503, %v499
  %v552 = vld [vmem:[%s0] sm:$0xf]
  %v553 = vld [vmem:[%s0 + $0x4] sm:$0xf]
  %v554 = vld [vmem:[%s3] sm:$0x7]
  %v556 = vlaneseq
  %v557 = vshrl.u32 %v556, 7
  %v558 = vsub.s32 0, %v557
  %v559 = vrot.slane %v554, %v558
  %v560 = vlaneseq
  %v561 = vshrl.u32 %v560, 7
  %v562 = vsub.s32 1, %v561
  %v563 = vrot.slane %v554, %v562
  %v564 = vlaneseq
  %v565 = vshrl.u32 %v564, 7
  %v566 = vsub.s32 2, %v565
  %v567 = vrot.slane %v554, %v566
  %v573 = vunpack.c.l.b16 %v552
  %v574 = vunpack.c.l.b16 %v553
  %v575 = vpack.c.b16 %v574, %v573
  %vm576 = vcmask 261120
  %v578 = vsel %vm576, %v575, 0
  %580 = vmatprep.subr.bf16.mxu0 %v547
  %581 = vmatpush1.bf16.msra.mxu0 %v546
  %582 = vmatprep.subr.bf16.mxu0 %v550
  %583 = vmatpush1.bf16.msra.mxu0 %v549
  %584 = vmatprep.subr.bf16.mxu0 0
  %585 = vmatpush1.bf16.msra.mxu0 0
  %586 = vmatprep.subr.bf16.mxu0 0
  %587 = vmatpush1.bf16.msra.mxu0 0
  %588 = vmatprep.subr.bf16.mxu0 0
  %589 = vmatpush1.bf16.msra.mxu0 0
  %590 = vmatprep.subr.bf16.mxu0 0
  %591 = vmatpush1.bf16.msra.mxu0 0
  %592 = vmatprep.subr.bf16.mxu0 0
  %593 = vmatpush1.bf16.msra.mxu0 0
  %594 = vmatprep.subr.bf16.mxu0 0
  %595 = vmatpush1.bf16.msra.mxu0 0
  %596 = vmatprep.subr.bf16.mxu0 0
  %597 = vmatpush1.bf16.msra.mxu0 0
  %598 = vmatprep.subr.bf16.mxu0 0
  %599 = vmatpush1.bf16.msra.mxu0 0
  %600 = vmatprep.subr.bf16.mxu0 0
  %601 = vmatpush1.bf16.msra.mxu0 0
  %602 = vmatprep.subr.bf16.mxu0 0
  %603 = vmatpush1.bf16.msra.mxu0 0
  %604 = vmatprep.subr.bf16.mxu0 0
  %605 = vmatpush1.bf16.msra.mxu0 0
  %606 = vmatprep.subr.bf16.mxu0 0
  %607 = vmatpush1.bf16.msra.mxu0 0
  %608 = vmatprep.subr.bf16.mxu0 0
  %609 = vmatpush1.bf16.msra.mxu0 0
  %610 = vmatprep.subr.bf16.mxu0 0
  %611 = vmatpush1.bf16.msra.mxu0 0
  %612 = vmatprep.mubr.bf16.mxu0 0
  %613 = vmatmul.mubr.bf16.gmra.mrb[0].mxu0 %v578
  %v614 = vpop.f32.mrb[0].mxu0
  %v615 = vadd.f32 %v559, %v614
  %v616 = vpop.f32.mrb[0].mxu0
  %v617 = vadd.f32 %v563, %v616
  %v618 = vpop.f32.mrb[0].mxu0
  %v619 = vadd.f32 %v559, %v618
  %v620 = vpop.f32.mrb[0].mxu0
  %v621 = vadd.f32 %v563, %v620
  %622 = vdwg.mxu0
  %623 = vmatprep.subr.bf16.mxu0 0
  %624 = vmatpush1.bf16.msra.mxu0 %v548
  %625 = vmatprep.subr.bf16.mxu0 0
  %626 = vmatpush1.bf16.msra.mxu0 %v551
  %627 = vmatprep.subr.bf16.mxu0 0
  %628 = vmatpush1.bf16.msra.mxu0 0
  %629 = vmatprep.subr.bf16.mxu0 0
  %630 = vmatpush1.bf16.msra.mxu0 0
  %631 = vmatprep.subr.bf16.mxu0 0
  %632 = vmatpush1.bf16.msra.mxu0 0
  %633 = vmatprep.subr.bf16.mxu0 0
  %634 = vmatpush1.bf16.msra.mxu0 0
  %635 = vmatprep.subr.bf16.mxu0 0
  %636 = vmatpush1.bf16.msra.mxu0 0
  %637 = vmatprep.subr.bf16.mxu0 0
  %638 = vmatpush1.bf16.msra.mxu0 0
  %639 = vmatprep.subr.bf16.mxu0 0
  %640 = vmatpush1.bf16.msra.mxu0 0
  %641 = vmatprep.subr.bf16.mxu0 0
  %642 = vmatpush1.bf16.msra.mxu0 0
  %643 = vmatprep.subr.bf16.mxu0 0
  %644 = vmatpush1.bf16.msra.mxu0 0
  %645 = vmatprep.subr.bf16.mxu0 0
  %646 = vmatpush1.bf16.msra.mxu0 0
  %647 = vmatprep.subr.bf16.mxu0 0
  %648 = vmatpush1.bf16.msra.mxu0 0
  %649 = vmatprep.subr.bf16.mxu0 0
  %650 = vmatpush1.bf16.msra.mxu0 0
  %651 = vmatprep.subr.bf16.mxu0 0
  %652 = vmatpush1.bf16.msra.mxu0 0
  %653 = vmatprep.subr.bf16.mxu0 0
  %654 = vmatpush1.bf16.msra.mxu0 0
  %655 = vmatprep.mubr.bf16.mxu0 0
  %656 = vmatmul.mubr.bf16.gmra.mrb[0].mxu0 %v578
  %v657 = vpop.f32.mrb[0].mxu0
  %v658 = vadd.f32 %v567, %v657
  %v659 = vpop.f32.mrb[0].mxu0
  %v660 = vpop.f32.mrb[0].mxu0
  %v661 = vadd.f32 %v567, %v660
  %v662 = vpop.f32.mrb[0].mxu0
  %663 = vdwg.mxu0
  %v664 = vadd.f32 %v615, %v540
  %v665 = vadd.f32 %v619, %v543
  %v666 = vxor.u32 %v664, 2147483648
  %v667 = vxor.u32 %v665, 2147483648
  %v668 = vmul.f32 %v666, 1.442695
  %v669 = vpow.pop %v668
  %v670 = vmul.f32 %v667, 1.442695
  %v671 = vpow.pop %v670
  %v672 = vadd.f32 %v669, 1.0
  %v673 = vadd.f32 %v671, 1.0
  %v674 = vrcp.pop %v672
  %v675 = vmul.f32 1.0, %v674
  %v676 = vrcp.pop %v673
  %v677 = vmul.f32 1.0, %v676
  %v678 = vadd.f32 %v617, %v540
  %v679 = vadd.f32 %v621, %v543
  %v680 = vxor.u32 %v678, 2147483648
  %v681 = vxor.u32 %v679, 2147483648
  %v682 = vmul.f32 %v680, 1.442695
  %v683 = vpow.pop %v682
  %v684 = vmul.f32 %v681, 1.442695
  %v685 = vpow.pop %v684
  %v686 = vadd.f32 %v683, 1.0
  %v687 = vadd.f32 %v685, 1.0
  %v688 = vrcp.pop %v686
  %v689 = vmul.f32 1.0, %v688
  %v690 = vrcp.pop %v687
  %v691 = vmul.f32 1.0, %v690
  %v692 = vmul.f32 %v689, %v21
  %v693 = vmul.f32 %v691, %v22
  %v694 = vpack.c.bf16 %v693, %v692
  %v695 = vld [vmem:[%s4] sm:$0xf]
  %v696 = vld [vmem:[%s4 + $0x4] sm:$0xf]
  %v697 = vld [vmem:[%s4 + $0x8] sm:$0xf]
  %v698 = vld [vmem:[%s4 + $0xc] sm:$0xf]
  %v699 = vld [vmem:[%s4 + $0x10] sm:$0xf]
  %v700 = vld [vmem:[%s4 + $0x14] sm:$0xf]
  %v701 = vld [vmem:[%s4 + $0x18] sm:$0xf]
  %v702 = vld [vmem:[%s4 + $0x1c] sm:$0xf]
  %v703 = vld [vmem:[%s4 + $0x20] sm:$0xf]
  %v704 = vld [vmem:[%s4 + $0x24] sm:$0xf]
  %v705 = vld [vmem:[%s4 + $0x28] sm:$0xf]
  %v706 = vld [vmem:[%s4 + $0x2c] sm:$0xf]
  %v707 = vld [vmem:[%s4 + $0x30] sm:$0xf]
  %v708 = vld [vmem:[%s4 + $0x34] sm:$0xf]
  %v709 = vld [vmem:[%s4 + $0x38] sm:$0xf]
  %v710 = vld [vmem:[%s4 + $0x3c] sm:$0xf]
  %v727 = vunpack.c.l.b16 %v695
  %v728 = vunpack.c.l.b16 %v696
  %v729 = vunpack.c.l.b16 %v697
  %v730 = vunpack.c.l.b16 %v698
  %v731 = vunpack.c.l.b16 %v699
  %v732 = vunpack.c.l.b16 %v700
  %v733 = vunpack.c.l.b16 %v701
  %v734 = vunpack.c.l.b16 %v702
  %v735 = vunpack.c.l.b16 %v703
  %v736 = vunpack.c.l.b16 %v704
  %v737 = vunpack.c.l.b16 %v705
  %v738 = vunpack.c.l.b16 %v706
  %v739 = vunpack.c.l.b16 %v707
  %v740 = vunpack.c.l.b16 %v708
  %v741 = vunpack.c.l.b16 %v709
  %v742 = vunpack.c.l.b16 %v710
  %v743 = vpack.c.b16 %v728, %v727
  %v744 = vpack.c.b16 %v730, %v729
  %v745 = vpack.c.b16 %v732, %v731
  %v746 = vpack.c.b16 %v734, %v733
  %v747 = vpack.c.b16 %v736, %v735
  %v748 = vpack.c.b16 %v738, %v737
  %v749 = vpack.c.b16 %v740, %v739
  %v750 = vpack.c.b16 %v742, %v741
  %759 = vmatprep.subr.bf16.mxu0 0
  %760 = vmatpush1.bf16.msra.mxu0 %v743
  %761 = vmatprep.subr.bf16.mxu0 0
  %762 = vmatpush1.bf16.msra.mxu0 %v744
  %763 = vmatprep.subr.bf16.mxu0 0
  %764 = vmatpush1.bf16.msra.mxu0 %v745
  %765 = vmatprep.subr.bf16.mxu0 0
  %766 = vmatpush1.bf16.msra.mxu0 %v746
  %767 = vmatprep.subr.bf16.mxu0 0
  %768 = vmatpush1.bf16.msra.mxu0 %v747
  %769 = vmatprep.subr.bf16.mxu0 0
  %770 = vmatpush1.bf16.msra.mxu0 %v748
  %771 = vmatprep.subr.bf16.mxu0 0
  %772 = vmatpush1.bf16.msra.mxu0 %v749
  %773 = vmatprep.subr.bf16.mxu0 0
  %774 = vmatpush1.bf16.msra.mxu0 %v750
  %775 = vmatprep.subr.bf16.mxu0 0
  %776 = vmatpush1.bf16.msra.mxu0 0
  %777 = vmatprep.subr.bf16.mxu0 0
  %778 = vmatpush1.bf16.msra.mxu0 0
  %779 = vmatprep.subr.bf16.mxu0 0
  %780 = vmatpush1.bf16.msra.mxu0 0
  %781 = vmatprep.subr.bf16.mxu0 0
  %782 = vmatpush1.bf16.msra.mxu0 0
  %783 = vmatprep.subr.bf16.mxu0 0
  %784 = vmatpush1.bf16.msra.mxu0 0
  %785 = vmatprep.subr.bf16.mxu0 0
  %786 = vmatpush1.bf16.msra.mxu0 0
  %787 = vmatprep.subr.bf16.mxu0 0
  %788 = vmatpush1.bf16.msra.mxu0 0
  %789 = vmatprep.subr.bf16.mxu0 0
  %790 = vmatpush1.bf16.msra.mxu0 0
  %791 = vmatprep.mubr.bf16.mxu0 0
  %792 = vmatmul.mubr.bf16.gmra.mrb[0].mxu0 %v694
  %v793 = vpop.f32.mrb[0].mxu0
  %v794 = vadd.f32 0.0, %v793
  %v795 = vpop.f32.mrb[0].mxu0
  %v796 = vpop.f32.mrb[0].mxu0
  %v797 = vadd.f32 0.0, %v796
  %v798 = vpop.f32.mrb[0].mxu0
  %799 = vdwg.mxu0
  %v800 = vadd.f32 %v658, %v794
  %v801 = vadd.f32 %v661, %v797
  %v802 = vtanh.pop %v800
  %v803 = vtanh.pop %v801
  %v804 = vsub.f32 1.0, %v675
  %v805 = vsub.f32 1.0, %v677
  %v806 = vmul.f32 %v804, %v21
  %v807 = vmul.f32 %v805, %v22
  %v808 = vmul.f32 %v675, %v802
  %v809 = vmul.f32 %v677, %v803
  %v810 = vadd.f32 %v806, %v808
  %v811 = vadd.f32 %v807, %v809
  %v812 = vpack.c.bf16 %v811, %v810
  %813 = vmatprep.subr.bf16.mxu0 %v265
  %814 = vmatpush1.bf16.msra.mxu0 %v264
  %815 = vmatprep.subr.bf16.mxu0 %v272
  %816 = vmatpush1.bf16.msra.mxu0 %v271
  %817 = vmatprep.subr.bf16.mxu0 %v279
  %818 = vmatpush1.bf16.msra.mxu0 %v278
  %819 = vmatprep.subr.bf16.mxu0 %v286
  %820 = vmatpush1.bf16.msra.mxu0 %v285
  %821 = vmatprep.subr.bf16.mxu0 %v293
  %822 = vmatpush1.bf16.msra.mxu0 %v292
  %823 = vmatprep.subr.bf16.mxu0 %v300
  %824 = vmatpush1.bf16.msra.mxu0 %v299
  %825 = vmatprep.subr.bf16.mxu0 %v307
  %826 = vmatpush1.bf16.msra.mxu0 %v306
  %827 = vmatprep.subr.bf16.mxu0 %v314
  %828 = vmatpush1.bf16.msra.mxu0 %v313
  %829 = vmatprep.subr.bf16.mxu0 0
  %830 = vmatpush1.bf16.msra.mxu0 0
  %831 = vmatprep.subr.bf16.mxu0 0
  %832 = vmatpush1.bf16.msra.mxu0 0
  %833 = vmatprep.subr.bf16.mxu0 0
  %834 = vmatpush1.bf16.msra.mxu0 0
  %835 = vmatprep.subr.bf16.mxu0 0
  %836 = vmatpush1.bf16.msra.mxu0 0
  %837 = vmatprep.subr.bf16.mxu0 0
  %838 = vmatpush1.bf16.msra.mxu0 0
  %839 = vmatprep.subr.bf16.mxu0 0
  %840 = vmatpush1.bf16.msra.mxu0 0
  %841 = vmatprep.subr.bf16.mxu0 0
  %842 = vmatpush1.bf16.msra.mxu0 0
  %843 = vmatprep.subr.bf16.mxu0 0
  %844 = vmatpush1.bf16.msra.mxu0 0
  %845 = vmatprep.mubr.bf16.mxu0 0
  %846 = vmatmul.mubr.bf16.gmra.mrb[0].mxu0 %v812
  %v847 = vpop.f32.mrb[0].mxu0
  %v848 = vadd.f32 0.0, %v847
  %v849 = vpop.f32.mrb[0].mxu0
  %v850 = vadd.f32 0.0, %v849
  %v851 = vpop.f32.mrb[0].mxu0
  %v852 = vadd.f32 0.0, %v851
  %v853 = vpop.f32.mrb[0].mxu0
  %v854 = vadd.f32 0.0, %v853
  %855 = vdwg.mxu0
  %856 = vmatprep.subr.bf16.mxu0 %v267
  %857 = vmatpush1.bf16.msra.mxu0 %v266
  %858 = vmatprep.subr.bf16.mxu0 %v274
  %859 = vmatpush1.bf16.msra.mxu0 %v273
  %860 = vmatprep.subr.bf16.mxu0 %v281
  %861 = vmatpush1.bf16.msra.mxu0 %v280
  %862 = vmatprep.subr.bf16.mxu0 %v288
  %863 = vmatpush1.bf16.msra.mxu0 %v287
  %864 = vmatprep.subr.bf16.mxu0 %v295
  %865 = vmatpush1.bf16.msra.mxu0 %v294
  %866 = vmatprep.subr.bf16.mxu0 %v302
  %867 = vmatpush1.bf16.msra.mxu0 %v301
  %868 = vmatprep.subr.bf16.mxu0 %v309
  %869 = vmatpush1.bf16.msra.mxu0 %v308
  %870 = vmatprep.subr.bf16.mxu0 %v316
  %871 = vmatpush1.bf16.msra.mxu0 %v315
  %872 = vmatprep.subr.bf16.mxu0 0
  %873 = vmatpush1.bf16.msra.mxu0 0
  %874 = vmatprep.subr.bf16.mxu0 0
  %875 = vmatpush1.bf16.msra.mxu0 0
  %876 = vmatprep.subr.bf16.mxu0 0
  %877 = vmatpush1.bf16.msra.mxu0 0
  %878 = vmatprep.subr.bf16.mxu0 0
  %879 = vmatpush1.bf16.msra.mxu0 0
  %880 = vmatprep.subr.bf16.mxu0 0
  %881 = vmatpush1.bf16.msra.mxu0 0
  %882 = vmatprep.subr.bf16.mxu0 0
  %883 = vmatpush1.bf16.msra.mxu0 0
  %884 = vmatprep.subr.bf16.mxu0 0
  %885 = vmatpush1.bf16.msra.mxu0 0
  %886 = vmatprep.subr.bf16.mxu0 0
  %887 = vmatpush1.bf16.msra.mxu0 0
  %888 = vmatprep.mubr.bf16.mxu0 0
  %889 = vmatmul.mubr.bf16.gmra.mrb[0].mxu0 %v812
  %v890 = vpop.f32.mrb[0].mxu0
  %v891 = vadd.f32 0.0, %v890
  %v892 = vpop.f32.mrb[0].mxu0
  %v893 = vadd.f32 0.0, %v892
  %v894 = vpop.f32.mrb[0].mxu0
  %v895 = vadd.f32 0.0, %v894
  %v896 = vpop.f32.mrb[0].mxu0
  %v897 = vadd.f32 0.0, %v896
  %898 = vdwg.mxu0
  %899 = vmatprep.subr.bf16.mxu0 %v269
  %900 = vmatpush1.bf16.msra.mxu0 %v268
  %901 = vmatprep.subr.bf16.mxu0 %v276
  %902 = vmatpush1.bf16.msra.mxu0 %v275
  %903 = vmatprep.subr.bf16.mxu0 %v283
  %904 = vmatpush1.bf16.msra.mxu0 %v282
  %905 = vmatprep.subr.bf16.mxu0 %v290
  %906 = vmatpush1.bf16.msra.mxu0 %v289
  %907 = vmatprep.subr.bf16.mxu0 %v297
  %908 = vmatpush1.bf16.msra.mxu0 %v296
  %909 = vmatprep.subr.bf16.mxu0 %v304
  %910 = vmatpush1.bf16.msra.mxu0 %v303
  %911 = vmatprep.subr.bf16.mxu0 %v311
  %912 = vmatpush1.bf16.msra.mxu0 %v310
  %913 = vmatprep.subr.bf16.mxu0 %v318
  %914 = vmatpush1.bf16.msra.mxu0 %v317
  %915 = vmatprep.subr.bf16.mxu0 0
  %916 = vmatpush1.bf16.msra.mxu0 0
  %917 = vmatprep.subr.bf16.mxu0 0
  %918 = vmatpush1.bf16.msra.mxu0 0
  %919 = vmatprep.subr.bf16.mxu0 0
  %920 = vmatpush1.bf16.msra.mxu0 0
  %921 = vmatprep.subr.bf16.mxu0 0
  %922 = vmatpush1.bf16.msra.mxu0 0
  %923 = vmatprep.subr.bf16.mxu0 0
  %924 = vmatpush1.bf16.msra.mxu0 0
  %925 = vmatprep.subr.bf16.mxu0 0
  %926 = vmatpush1.bf16.msra.mxu0 0
  %927 = vmatprep.subr.bf16.mxu0 0
  %928 = vmatpush1.bf16.msra.mxu0 0
  %929 = vmatprep.subr.bf16.mxu0 0
  %930 = vmatpush1.bf16.msra.mxu0 0
  %931 = vmatprep.mubr.bf16.mxu0 0
  %932 = vmatmul.mubr.bf16.gmra.mrb[0].mxu0 %v812
  %v933 = vpop.f32.mrb[0].mxu0
  %v934 = vadd.f32 0.0, %v933
  %v935 = vpop.f32.mrb[0].mxu0
  %v936 = vadd.f32 0.0, %v935
  %v937 = vpop.f32.mrb[0].mxu0
  %v938 = vadd.f32 0.0, %v937
  %v939 = vpop.f32.mrb[0].mxu0
  %v940 = vadd.f32 0.0, %v939
  %941 = vdwg.mxu0
  %942 = vmatprep.subr.bf16.mxu0 0
  %943 = vmatpush1.bf16.msra.mxu0 %v270
  %944 = vmatprep.subr.bf16.mxu0 0
  %945 = vmatpush1.bf16.msra.mxu0 %v277
  %946 = vmatprep.subr.bf16.mxu0 0
  %947 = vmatpush1.bf16.msra.mxu0 %v284
  %948 = vmatprep.subr.bf16.mxu0 0
  %949 = vmatpush1.bf16.msra.mxu0 %v291
  %950 = vmatprep.subr.bf16.mxu0 0
  %951 = vmatpush1.bf16.msra.mxu0 %v298
  %952 = vmatprep.subr.bf16.mxu0 0
  %953 = vmatpush1.bf16.msra.mxu0 %v305
  %954 = vmatprep.subr.bf16.mxu0 0
  %955 = vmatpush1.bf16.msra.mxu0 %v312
  %956 = vmatprep.subr.bf16.mxu0 0
  %957 = vmatpush1.bf16.msra.mxu0 %v319
  %958 = vmatprep.subr.bf16.mxu0 0
  %959 = vmatpush1.bf16.msra.mxu0 0
  %960 = vmatprep.subr.bf16.mxu0 0
  %961 = vmatpush1.bf16.msra.mxu0 0
  %962 = vmatprep.subr.bf16.mxu0 0
  %963 = vmatpush1.bf16.msra.mxu0 0
  %964 = vmatprep.subr.bf16.mxu0 0
  %965 = vmatpush1.bf16.msra.mxu0 0
  %966 = vmatprep.subr.bf16.mxu0 0
  %967 = vmatpush1.bf16.msra.mxu0 0
  %968 = vmatprep.subr.bf16.mxu0 0
  %969 = vmatpush1.bf16.msra.mxu0 0
  %970 = vmatprep.subr.bf16.mxu0 0
  %971 = vmatpush1.bf16.msra.mxu0 0
  %972 = vmatprep.subr.bf16.mxu0 0
  %973 = vmatpush1.bf16.msra.mxu0 0
  %974 = vmatprep.mubr.bf16.mxu0 0
  %975 = vmatmul.mubr.bf16.gmra.mrb[0].mxu0 %v812
  %v976 = vpop.f32.mrb[0].mxu0
  %v977 = vadd.f32 0.0, %v976
  %v978 = vpop.f32.mrb[0].mxu0
  %v979 = vpop.f32.mrb[0].mxu0
  %v980 = vadd.f32 0.0, %v979
  %v981 = vpop.f32.mrb[0].mxu0
  %982 = vdwg.mxu0
  %v983 = vpack.c.bf16 %v852, %v848
  %v984 = vpack.c.bf16 %v854, %v850
  %v985 = vpack.c.bf16 %v895, %v891
  %v986 = vpack.c.bf16 %v897, %v893
  %v987 = vpack.c.bf16 %v938, %v934
  %v988 = vpack.c.bf16 %v940, %v936
  %989 = vmatprep.subr.bf16.mxu0 %v984
  %990 = vmatpush1.bf16.msra.mxu0 %v983
  %991 = vmatprep.subr.bf16.mxu0 %v987
  %992 = vmatpush1.bf16.msra.mxu0 %v986
  %993 = vmatprep.subr.bf16.mxu0 0
  %994 = vmatpush1.bf16.msra.mxu0 0
  %995 = vmatprep.subr.bf16.mxu0 0
  %996 = vmatpush1.bf16.msra.mxu0 0
  %997 = vmatprep.subr.bf16.mxu0 0
  %998 = vmatpush1.bf16.msra.mxu0 0
  %999 = vmatprep.subr.bf16.mxu0 0
  %1000 = vmatpush1.bf16.msra.mxu0 0
  %1001 = vmatprep.subr.bf16.mxu0 0
  %1002 = vmatpush1.bf16.msra.mxu0 0
  %1003 = vmatprep.subr.bf16.mxu0 0
  %1004 = vmatpush1.bf16.msra.mxu0 0
  %1005 = vmatprep.subr.bf16.mxu0 0
  %1006 = vmatpush1.bf16.msra.mxu0 0
  %1007 = vmatprep.subr.bf16.mxu0 0
  %1008 = vmatpush1.bf16.msra.mxu0 0
  %1009 = vmatprep.subr.bf16.mxu0 0
  %1010 = vmatpush1.bf16.msra.mxu0 0
  %1011 = vmatprep.subr.bf16.mxu0 0
  %1012 = vmatpush1.bf16.msra.mxu0 0
  %1013 = vmatprep.subr.bf16.mxu0 0
  %1014 = vmatpush1.bf16.msra.mxu0 0
  %1015 = vmatprep.subr.bf16.mxu0 0
  %1016 = vmatpush1.bf16.msra.mxu0 0
  %1017 = vmatprep.subr.bf16.mxu0 0
  %1018 = vmatpush1.bf16.msra.mxu0 0
  %1019 = vmatprep.subr.bf16.mxu0 0
  %1020 = vmatpush1.bf16.msra.mxu0 0
  %1021 = vmatprep.mubr.bf16.mxu0 0
  %1022 = vmatmul.mubr.bf16.gmra.mrb[0].mxu0 %v578
  %v1023 = vpop.f32.mrb[0].mxu0
  %v1024 = vadd.f32 %v559, %v1023
  %v1025 = vpop.f32.mrb[0].mxu0
  %v1026 = vadd.f32 %v563, %v1025
  %v1027 = vpop.f32.mrb[0].mxu0
  %v1028 = vadd.f32 %v559, %v1027
  %v1029 = vpop.f32.mrb[0].mxu0
  %v1030 = vadd.f32 %v563, %v1029
  %1031 = vdwg.mxu0
  %1032 = vmatprep.subr.bf16.mxu0 0
  %1033 = vmatpush1.bf16.msra.mxu0 %v985
  %1034 = vmatprep.subr.bf16.mxu0 0
  %1035 = vmatpush1.bf16.msra.mxu0 %v988
  %1036 = vmatprep.subr.bf16.mxu0 0
  %1037 = vmatpush1.bf16.msra.mxu0 0
  %1038 = vmatprep.subr.bf16.mxu0 0
  %1039 = vmatpush1.bf16.msra.mxu0 0
  %1040 = vmatprep.subr.bf16.mxu0 0
  %1041 = vmatpush1.bf16.msra.mxu0 0
  %1042 = vmatprep.subr.bf16.mxu0 0
  %1043 = vmatpush1.bf16.msra.mxu0 0
  %1044 = vmatprep.subr.bf16.mxu0 0
  %1045 = vmatpush1.bf16.msra.mxu0 0
  %1046 = vmatprep.subr.bf16.mxu0 0
  %1047 = vmatpush1.bf16.msra.mxu0 0
  %1048 = vmatprep.subr.bf16.mxu0 0
  %1049 = vmatpush1.bf16.msra.mxu0 0
  %1050 = vmatprep.subr.bf16.mxu0 0
  %1051 = vmatpush1.bf16.msra.mxu0 0
  %1052 = vmatprep.subr.bf16.mxu0 0
  %1053 = vmatpush1.bf16.msra.mxu0 0
  %1054 = vmatprep.subr.bf16.mxu0 0
  %1055 = vmatpush1.bf16.msra.mxu0 0
  %1056 = vmatprep.subr.bf16.mxu0 0
  %1057 = vmatpush1.bf16.msra.mxu0 0
  %1058 = vmatprep.subr.bf16.mxu0 0
  %1059 = vmatpush1.bf16.msra.mxu0 0
  %1060 = vmatprep.subr.bf16.mxu0 0
  %1061 = vmatpush1.bf16.msra.mxu0 0
  %1062 = vmatprep.subr.bf16.mxu0 0
  %1063 = vmatpush1.bf16.msra.mxu0 0
  %1064 = vmatprep.mubr.bf16.mxu0 0
  %1065 = vmatmul.mubr.bf16.gmra.mrb[0].mxu0 %v578
  %v1066 = vpop.f32.mrb[0].mxu0
  %v1067 = vadd.f32 %v567, %v1066
  %v1068 = vpop.f32.mrb[0].mxu0
  %v1069 = vpop.f32.mrb[0].mxu0
  %v1070 = vadd.f32 %v567, %v1069
  %v1071 = vpop.f32.mrb[0].mxu0
  %1072 = vdwg.mxu0
  %v1073 = vadd.f32 %v1024, %v977
  %v1074 = vadd.f32 %v1028, %v980
  %v1075 = vxor.u32 %v1073, 2147483648
  %v1076 = vxor.u32 %v1074, 2147483648
  %v1077 = vmul.f32 %v1075, 1.442695
  %v1078 = vpow.pop %v1077
  %v1079 = vmul.f32 %v1076, 1.442695
  %v1080 = vpow.pop %v1079
  %v1081 = vadd.f32 %v1078, 1.0
  %v1082 = vadd.f32 %v1080, 1.0
  %v1083 = vrcp.pop %v1081
  %v1084 = vmul.f32 1.0, %v1083
  %v1085 = vrcp.pop %v1082
  %v1086 = vmul.f32 1.0, %v1085
  %v1087 = vadd.f32 %v1026, %v977
  %v1088 = vadd.f32 %v1030, %v980
  %v1089 = vxor.u32 %v1087, 2147483648
  %v1090 = vxor.u32 %v1088, 2147483648
  %v1091 = vmul.f32 %v1089, 1.442695
  %v1092 = vpow.pop %v1091
  %v1093 = vmul.f32 %v1090, 1.442695
  %v1094 = vpow.pop %v1093
  %v1095 = vadd.f32 %v1092, 1.0
  %v1096 = vadd.f32 %v1094, 1.0
  %v1097 = vrcp.pop %v1095
  %v1098 = vmul.f32 1.0, %v1097
  %v1099 = vrcp.pop %v1096
  %v1100 = vmul.f32 1.0, %v1099
  %v1101 = vmul.f32 %v1098, %v810
  %v1102 = vmul.f32 %v1100, %v811
  %v1103 = vpack.c.bf16 %v1102, %v1101
  %1104 = vmatprep.subr.bf16.mxu0 0
  %1105 = vmatpush1.bf16.msra.mxu0 %v743
  %1106 = vmatprep.subr.bf16.mxu0 0
  %1107 = vmatpush1.bf16.msra.mxu0 %v744
  %1108 = vmatprep.subr.bf16.mxu0 0
  %1109 = vmatpush1.bf16.msra.mxu0 %v745
  %1110 = vmatprep.subr.bf16.mxu0 0
  %1111 = vmatpush1.bf16.msra.mxu0 %v746
  %1112 = vmatprep.subr.bf16.mxu0 0
  %1113 = vmatpush1.bf16.msra.mxu0 %v747
  %1114 = vmatprep.subr.bf16.mxu0 0
  %1115 = vmatpush1.bf16.msra.mxu0 %v748
  %1116 = vmatprep.subr.bf16.mxu0 0
  %1117 = vmatpush1.bf16.msra.mxu0 %v749
  %1118 = vmatprep.subr.bf16.mxu0 0
  %1119 = vmatpush1.bf16.msra.mxu0 %v750
  %1120 = vmatprep.subr.bf16.mxu0 0
  %1121 = vmatpush1.bf16.msra.mxu0 0
  %1122 = vmatprep.subr.bf16.mxu0 0
  %1123 = vmatpush1.bf16.msra.mxu0 0
  %1124 = vmatprep.subr.bf16.mxu0 0
  %1125 = vmatpush1.bf16.msra.mxu0 0
  %1126 = vmatprep.subr.bf16.mxu0 0
  %1127 = vmatpush1.bf16.msra.mxu0 0
  %1128 = vmatprep.subr.bf16.mxu0 0
  %1129 = vmatpush1.bf16.msra.mxu0 0
  %1130 = vmatprep.subr.bf16.mxu0 0
  %1131 = vmatpush1.bf16.msra.mxu0 0
  %1132 = vmatprep.subr.bf16.mxu0 0
  %1133 = vmatpush1.bf16.msra.mxu0 0
  %1134 = vmatprep.subr.bf16.mxu0 0
  %1135 = vmatpush1.bf16.msra.mxu0 0
  %1136 = vmatprep.mubr.bf16.mxu0 0
  %1137 = vmatmul.mubr.bf16.gmra.mrb[0].mxu0 %v1103
  %v1138 = vpop.f32.mrb[0].mxu0
  %v1139 = vadd.f32 0.0, %v1138
  %v1140 = vpop.f32.mrb[0].mxu0
  %v1141 = vpop.f32.mrb[0].mxu0
  %v1142 = vadd.f32 0.0, %v1141
  %v1143 = vpop.f32.mrb[0].mxu0
  %1144 = vdwg.mxu0
  %v1145 = vadd.f32 %v1067, %v1139
  %v1146 = vadd.f32 %v1070, %v1142
  %v1147 = vtanh.pop %v1145
  %v1148 = vtanh.pop %v1146
  %v1149 = vsub.f32 1.0, %v1084
  %v1150 = vsub.f32 1.0, %v1086
  %v1151 = vmul.f32 %v1149, %v810
  %v1152 = vmul.f32 %v1150, %v811
  %v1153 = vmul.f32 %v1084, %v1147
  %v1154 = vmul.f32 %v1086, %v1148
  %v1155 = vadd.f32 %v1151, %v1153
  %v1156 = vadd.f32 %v1152, %v1154
  %v1157 = vpack.c.bf16 %v1156, %v1155
  %1158 = vmatprep.subr.bf16.mxu0 %v265
  %1159 = vmatpush1.bf16.msra.mxu0 %v264
  %1160 = vmatprep.subr.bf16.mxu0 %v272
  %1161 = vmatpush1.bf16.msra.mxu0 %v271
  %1162 = vmatprep.subr.bf16.mxu0 %v279
  %1163 = vmatpush1.bf16.msra.mxu0 %v278
  %1164 = vmatprep.subr.bf16.mxu0 %v286
  %1165 = vmatpush1.bf16.msra.mxu0 %v285
  %1166 = vmatprep.subr.bf16.mxu0 %v293
  %1167 = vmatpush1.bf16.msra.mxu0 %v292
  %1168 = vmatprep.subr.bf16.mxu0 %v300
  %1169 = vmatpush1.bf16.msra.mxu0 %v299
  %1170 = vmatprep.subr.bf16.mxu0 %v307
  %1171 = vmatpush1.bf16.msra.mxu0 %v306
  %1172 = vmatprep.subr.bf16.mxu0 %v314
  %1173 = vmatpush1.bf16.msra.mxu0 %v313
  %1174 = vmatprep.subr.bf16.mxu0 0
  %1175 = vmatpush1.bf16.msra.mxu0 0
  %1176 = vmatprep.subr.bf16.mxu0 0
  %1177 = vmatpush1.bf16.msra.mxu0 0
  %1178 = vmatprep.subr.bf16.mxu0 0
  %1179 = vmatpush1.bf16.msra.mxu0 0
  %1180 = vmatprep.subr.bf16.mxu0 0
  %1181 = vmatpush1.bf16.msra.mxu0 0
  %1182 = vmatprep.subr.bf16.mxu0 0
  %1183 = vmatpush1.bf16.msra.mxu0 0
  %1184 = vmatprep.subr.bf16.mxu0 0
  %1185 = vmatpush1.bf16.msra.mxu0 0
  %1186 = vmatprep.subr.bf16.mxu0 0
  %1187 = vmatpush1.bf16.msra.mxu0 0
  %1188 = vmatprep.subr.bf16.mxu0 0
  %1189 = vmatpush1.bf16.msra.mxu0 0
  %1190 = vmatprep.mubr.bf16.mxu0 0
  %1191 = vmatmul.mubr.bf16.gmra.mrb[0].mxu0 %v1157
  %v1192 = vpop.f32.mrb[0].mxu0
  %v1193 = vadd.f32 0.0, %v1192
  %v1194 = vpop.f32.mrb[0].mxu0
  %v1195 = vadd.f32 0.0, %v1194
  %v1196 = vpop.f32.mrb[0].mxu0
  %v1197 = vadd.f32 0.0, %v1196
  %v1198 = vpop.f32.mrb[0].mxu0
  %v1199 = vadd.f32 0.0, %v1198
  %1200 = vdwg.mxu0
  %1201 = vmatprep.subr.bf16.mxu0 %v267
  %1202 = vmatpush1.bf16.msra.mxu0 %v266
  %1203 = vmatprep.subr.bf16.mxu0 %v274
  %1204 = vmatpush1.bf16.msra.mxu0 %v273
  %1205 = vmatprep.subr.bf16.mxu0 %v281
  %1206 = vmatpush1.bf16.msra.mxu0 %v280
  %1207 = vmatprep.subr.bf16.mxu0 %v288
  %1208 = vmatpush1.bf16.msra.mxu0 %v287
  %1209 = vmatprep.subr.bf16.mxu0 %v295
  %1210 = vmatpush1.bf16.msra.mxu0 %v294
  %1211 = vmatprep.subr.bf16.mxu0 %v302
  %1212 = vmatpush1.bf16.msra.mxu0 %v301
  %1213 = vmatprep.subr.bf16.mxu0 %v309
  %1214 = vmatpush1.bf16.msra.mxu0 %v308
  %1215 = vmatprep.subr.bf16.mxu0 %v316
  %1216 = vmatpush1.bf16.msra.mxu0 %v315
  %1217 = vmatprep.subr.bf16.mxu0 0
  %1218 = vmatpush1.bf16.msra.mxu0 0
  %1219 = vmatprep.subr.bf16.mxu0 0
  %1220 = vmatpush1.bf16.msra.mxu0 0
  %1221 = vmatprep.subr.bf16.mxu0 0
  %1222 = vmatpush1.bf16.msra.mxu0 0
  %1223 = vmatprep.subr.bf16.mxu0 0
  %1224 = vmatpush1.bf16.msra.mxu0 0
  %1225 = vmatprep.subr.bf16.mxu0 0
  %1226 = vmatpush1.bf16.msra.mxu0 0
  %1227 = vmatprep.subr.bf16.mxu0 0
  %1228 = vmatpush1.bf16.msra.mxu0 0
  %1229 = vmatprep.subr.bf16.mxu0 0
  %1230 = vmatpush1.bf16.msra.mxu0 0
  %1231 = vmatprep.subr.bf16.mxu0 0
  %1232 = vmatpush1.bf16.msra.mxu0 0
  %1233 = vmatprep.mubr.bf16.mxu0 0
  %1234 = vmatmul.mubr.bf16.gmra.mrb[0].mxu0 %v1157
  %v1235 = vpop.f32.mrb[0].mxu0
  %v1236 = vadd.f32 0.0, %v1235
  %v1237 = vpop.f32.mrb[0].mxu0
  %v1238 = vadd.f32 0.0, %v1237
  %v1239 = vpop.f32.mrb[0].mxu0
  %v1240 = vadd.f32 0.0, %v1239
  %v1241 = vpop.f32.mrb[0].mxu0
  %v1242 = vadd.f32 0.0, %v1241
  %1243 = vdwg.mxu0
  %1244 = vmatprep.subr.bf16.mxu0 %v269
  %1245 = vmatpush1.bf16.msra.mxu0 %v268
  %1246 = vmatprep.subr.bf16.mxu0 %v276
  %1247 = vmatpush1.bf16.msra.mxu0 %v275
  %1248 = vmatprep.subr.bf16.mxu0 %v283
  %1249 = vmatpush1.bf16.msra.mxu0 %v282
  %1250 = vmatprep.subr.bf16.mxu0 %v290
  %1251 = vmatpush1.bf16.msra.mxu0 %v289
  %1252 = vmatprep.subr.bf16.mxu0 %v297
  %1253 = vmatpush1.bf16.msra.mxu0 %v296
  %1254 = vmatprep.subr.bf16.mxu0 %v304
  %1255 = vmatpush1.bf16.msra.mxu0 %v303
  %1256 = vmatprep.subr.bf16.mxu0 %v311
  %1257 = vmatpush1.bf16.msra.mxu0 %v310
  %1258 = vmatprep.subr.bf16.mxu0 %v318
  %1259 = vmatpush1.bf16.msra.mxu0 %v317
  %1260 = vmatprep.subr.bf16.mxu0 0
  %1261 = vmatpush1.bf16.msra.mxu0 0
  %1262 = vmatprep.subr.bf16.mxu0 0
  %1263 = vmatpush1.bf16.msra.mxu0 0
  %1264 = vmatprep.subr.bf16.mxu0 0
  %1265 = vmatpush1.bf16.msra.mxu0 0
  %1266 = vmatprep.subr.bf16.mxu0 0
  %1267 = vmatpush1.bf16.msra.mxu0 0
  %1268 = vmatprep.subr.bf16.mxu0 0
  %1269 = vmatpush1.bf16.msra.mxu0 0
  %1270 = vmatprep.subr.bf16.mxu0 0
  %1271 = vmatpush1.bf16.msra.mxu0 0
  %1272 = vmatprep.subr.bf16.mxu0 0
  %1273 = vmatpush1.bf16.msra.mxu0 0
  %1274 = vmatprep.subr.bf16.mxu0 0
  %1275 = vmatpush1.bf16.msra.mxu0 0
  %1276 = vmatprep.mubr.bf16.mxu0 0
  %1277 = vmatmul.mubr.bf16.gmra.mrb[0].mxu0 %v1157
  %v1278 = vpop.f32.mrb[0].mxu0
  %v1279 = vadd.f32 0.0, %v1278
  %v1280 = vpop.f32.mrb[0].mxu0
  %v1281 = vadd.f32 0.0, %v1280
  %v1282 = vpop.f32.mrb[0].mxu0
  %v1283 = vadd.f32 0.0, %v1282
  %v1284 = vpop.f32.mrb[0].mxu0
  %v1285 = vadd.f32 0.0, %v1284
  %1286 = vdwg.mxu0
  %1287 = vmatprep.subr.bf16.mxu0 0
  %1288 = vmatpush1.bf16.msra.mxu0 %v270
  %1289 = vmatprep.subr.bf16.mxu0 0
  %1290 = vmatpush1.bf16.msra.mxu0 %v277
  %1291 = vmatprep.subr.bf16.mxu0 0
  %1292 = vmatpush1.bf16.msra.mxu0 %v284
  %1293 = vmatprep.subr.bf16.mxu0 0
  %1294 = vmatpush1.bf16.msra.mxu0 %v291
  %1295 = vmatprep.subr.bf16.mxu0 0
  %1296 = vmatpush1.bf16.msra.mxu0 %v298
  %1297 = vmatprep.subr.bf16.mxu0 0
  %1298 = vmatpush1.bf16.msra.mxu0 %v305
  %1299 = vmatprep.subr.bf16.mxu0 0
  %1300 = vmatpush1.bf16.msra.mxu0 %v312
  %1301 = vmatprep.subr.bf16.mxu0 0
  %1302 = vmatpush1.bf16.msra.mxu0 %v319
  %1303 = vmatprep.subr.bf16.mxu0 0
  %1304 = vmatpush1.bf16.msra.mxu0 0
  %1305 = vmatprep.subr.bf16.mxu0 0
  %1306 = vmatpush1.bf16.msra.mxu0 0
  %1307 = vmatprep.subr.bf16.mxu0 0
  %1308 = vmatpush1.bf16.msra.mxu0 0
  %1309 = vmatprep.subr.bf16.mxu0 0
  %1310 = vmatpush1.bf16.msra.mxu0 0
  %1311 = vmatprep.subr.bf16.mxu0 0
  %1312 = vmatpush1.bf16.msra.mxu0 0
  %1313 = vmatprep.subr.bf16.mxu0 0
  %1314 = vmatpush1.bf16.msra.mxu0 0
  %1315 = vmatprep.subr.bf16.mxu0 0
  %1316 = vmatpush1.bf16.msra.mxu0 0
  %1317 = vmatprep.subr.bf16.mxu0 0
  %1318 = vmatpush1.bf16.msra.mxu0 0
  %1319 = vmatprep.mubr.bf16.mxu0 0
  %1320 = vmatmul.mubr.bf16.gmra.mrb[0].mxu0 %v1157
  %v1321 = vpop.f32.mrb[0].mxu0
  %v1322 = vadd.f32 0.0, %v1321
  %v1323 = vpop.f32.mrb[0].mxu0
  %v1324 = vpop.f32.mrb[0].mxu0
  %v1325 = vadd.f32 0.0, %v1324
  %v1326 = vpop.f32.mrb[0].mxu0
  %1327 = vdwg.mxu0
  %v1328 = vpack.c.bf16 %v1197, %v1193
  %v1329 = vpack.c.bf16 %v1199, %v1195
  %v1330 = vpack.c.bf16 %v1240, %v1236
  %v1331 = vpack.c.bf16 %v1242, %v1238
  %v1332 = vpack.c.bf16 %v1283, %v1279
  %v1333 = vpack.c.bf16 %v1285, %v1281
  %1334 = vmatprep.subr.bf16.mxu0 %v1329
  %1335 = vmatpush1.bf16.msra.mxu0 %v1328
  %1336 = vmatprep.subr.bf16.mxu0 %v1332
  %1337 = vmatpush1.bf16.msra.mxu0 %v1331
  %1338 = vmatprep.subr.bf16.mxu0 0
  %1339 = vmatpush1.bf16.msra.mxu0 0
  %1340 = vmatprep.subr.bf16.mxu0 0
  %1341 = vmatpush1.bf16.msra.mxu0 0
  %1342 = vmatprep.subr.bf16.mxu0 0
  %1343 = vmatpush1.bf16.msra.mxu0 0
  %1344 = vmatprep.subr.bf16.mxu0 0
  %1345 = vmatpush1.bf16.msra.mxu0 0
  %1346 = vmatprep.subr.bf16.mxu0 0
  %1347 = vmatpush1.bf16.msra.mxu0 0
  %1348 = vmatprep.subr.bf16.mxu0 0
  %1349 = vmatpush1.bf16.msra.mxu0 0
  %1350 = vmatprep.subr.bf16.mxu0 0
  %1351 = vmatpush1.bf16.msra.mxu0 0
  %1352 = vmatprep.subr.bf16.mxu0 0
  %1353 = vmatpush1.bf16.msra.mxu0 0
  %1354 = vmatprep.subr.bf16.mxu0 0
  %1355 = vmatpush1.bf16.msra.mxu0 0
  %1356 = vmatprep.subr.bf16.mxu0 0
  %1357 = vmatpush1.bf16.msra.mxu0 0
  %1358 = vmatprep.subr.bf16.mxu0 0
  %1359 = vmatpush1.bf16.msra.mxu0 0
  %1360 = vmatprep.subr.bf16.mxu0 0
  %1361 = vmatpush1.bf16.msra.mxu0 0
  %1362 = vmatprep.subr.bf16.mxu0 0
  %1363 = vmatpush1.bf16.msra.mxu0 0
  %1364 = vmatprep.subr.bf16.mxu0 0
  %1365 = vmatpush1.bf16.msra.mxu0 0
  %1366 = vmatprep.mubr.bf16.mxu0 0
  %1367 = vmatmul.mubr.bf16.gmra.mrb[0].mxu0 %v578
  %v1368 = vpop.f32.mrb[0].mxu0
  %v1369 = vadd.f32 %v559, %v1368
  %v1370 = vpop.f32.mrb[0].mxu0
  %v1371 = vadd.f32 %v563, %v1370
  %v1372 = vpop.f32.mrb[0].mxu0
  %v1373 = vadd.f32 %v559, %v1372
  %v1374 = vpop.f32.mrb[0].mxu0
  %v1375 = vadd.f32 %v563, %v1374
  %1376 = vdwg.mxu0
  %1377 = vmatprep.subr.bf16.mxu0 0
  %1378 = vmatpush1.bf16.msra.mxu0 %v1330
  %1379 = vmatprep.subr.bf16.mxu0 0
  %1380 = vmatpush1.bf16.msra.mxu0 %v1333
  %1381 = vmatprep.subr.bf16.mxu0 0
  %1382 = vmatpush1.bf16.msra.mxu0 0
  %1383 = vmatprep.subr.bf16.mxu0 0
  %1384 = vmatpush1.bf16.msra.mxu0 0
  %1385 = vmatprep.subr.bf16.mxu0 0
  %1386 = vmatpush1.bf16.msra.mxu0 0
  %1387 = vmatprep.subr.bf16.mxu0 0
  %1388 = vmatpush1.bf16.msra.mxu0 0
  %1389 = vmatprep.subr.bf16.mxu0 0
  %1390 = vmatpush1.bf16.msra.mxu0 0
  %1391 = vmatprep.subr.bf16.mxu0 0
  %1392 = vmatpush1.bf16.msra.mxu0 0
  %1393 = vmatprep.subr.bf16.mxu0 0
  %1394 = vmatpush1.bf16.msra.mxu0 0
  %1395 = vmatprep.subr.bf16.mxu0 0
  %1396 = vmatpush1.bf16.msra.mxu0 0
  %1397 = vmatprep.subr.bf16.mxu0 0
  %1398 = vmatpush1.bf16.msra.mxu0 0
  %1399 = vmatprep.subr.bf16.mxu0 0
  %1400 = vmatpush1.bf16.msra.mxu0 0
  %1401 = vmatprep.subr.bf16.mxu0 0
  %1402 = vmatpush1.bf16.msra.mxu0 0
  %1403 = vmatprep.subr.bf16.mxu0 0
  %1404 = vmatpush1.bf16.msra.mxu0 0
  %1405 = vmatprep.subr.bf16.mxu0 0
  %1406 = vmatpush1.bf16.msra.mxu0 0
  %1407 = vmatprep.subr.bf16.mxu0 0
  %1408 = vmatpush1.bf16.msra.mxu0 0
  %1409 = vmatprep.mubr.bf16.mxu0 0
  %1410 = vmatmul.mubr.bf16.gmra.mrb[0].mxu0 %v578
  %v1411 = vpop.f32.mrb[0].mxu0
  %v1412 = vadd.f32 %v567, %v1411
  %v1413 = vpop.f32.mrb[0].mxu0
  %v1414 = vpop.f32.mrb[0].mxu0
  %v1415 = vadd.f32 %v567, %v1414
  %v1416 = vpop.f32.mrb[0].mxu0
  %1417 = vdwg.mxu0
  %v1418 = vadd.f32 %v1369, %v1322
  %v1419 = vadd.f32 %v1373, %v1325
  %v1420 = vxor.u32 %v1418, 2147483648
  %v1421 = vxor.u32 %v1419, 2147483648
  %v1422 = vmul.f32 %v1420, 1.442695
  %v1423 = vpow.pop %v1422
  %v1424 = vmul.f32 %v1421, 1.442695
  %v1425 = vpow.pop %v1424
  %v1426 = vadd.f32 %v1423, 1.0
  %v1427 = vadd.f32 %v1425, 1.0
  %v1428 = vrcp.pop %v1426
  %v1429 = vmul.f32 1.0, %v1428
  %v1430 = vrcp.pop %v1427
  %v1431 = vmul.f32 1.0, %v1430
  %v1432 = vadd.f32 %v1371, %v1322
  %v1433 = vadd.f32 %v1375, %v1325
  %v1434 = vxor.u32 %v1432, 2147483648
  %v1435 = vxor.u32 %v1433, 2147483648
  %v1436 = vmul.f32 %v1434, 1.442695
  %v1437 = vpow.pop %v1436
  %v1438 = vmul.f32 %v1435, 1.442695
  %v1439 = vpow.pop %v1438
  %v1440 = vadd.f32 %v1437, 1.0
  %v1441 = vadd.f32 %v1439, 1.0
  %v1442 = vrcp.pop %v1440
  %v1443 = vmul.f32 1.0, %v1442
  %v1444 = vrcp.pop %v1441
  %v1445 = vmul.f32 1.0, %v1444
  %v1446 = vmul.f32 %v1443, %v1155
  %v1447 = vmul.f32 %v1445, %v1156
  %v1448 = vpack.c.bf16 %v1447, %v1446
  %1449 = vmatprep.subr.bf16.mxu0 0
  %1450 = vmatpush1.bf16.msra.mxu0 %v743
  %1451 = vmatprep.subr.bf16.mxu0 0
  %1452 = vmatpush1.bf16.msra.mxu0 %v744
  %1453 = vmatprep.subr.bf16.mxu0 0
  %1454 = vmatpush1.bf16.msra.mxu0 %v745
  %1455 = vmatprep.subr.bf16.mxu0 0
  %1456 = vmatpush1.bf16.msra.mxu0 %v746
  %1457 = vmatprep.subr.bf16.mxu0 0
  %1458 = vmatpush1.bf16.msra.mxu0 %v747
  %1459 = vmatprep.subr.bf16.mxu0 0
  %1460 = vmatpush1.bf16.msra.mxu0 %v748
  %1461 = vmatprep.subr.bf16.mxu0 0
  %1462 = vmatpush1.bf16.msra.mxu0 %v749
  %1463 = vmatprep.subr.bf16.mxu0 0
  %1464 = vmatpush1.bf16.msra.mxu0 %v750
  %1465 = vmatprep.subr.bf16.mxu0 0
  %1466 = vmatpush1.bf16.msra.mxu0 0
  %1467 = vmatprep.subr.bf16.mxu0 0
  %1468 = vmatpush1.bf16.msra.mxu0 0
  %1469 = vmatprep.subr.bf16.mxu0 0
  %1470 = vmatpush1.bf16.msra.mxu0 0
  %1471 = vmatprep.subr.bf16.mxu0 0
  %1472 = vmatpush1.bf16.msra.mxu0 0
  %1473 = vmatprep.subr.bf16.mxu0 0
  %1474 = vmatpush1.bf16.msra.mxu0 0
  %1475 = vmatprep.subr.bf16.mxu0 0
  %1476 = vmatpush1.bf16.msra.mxu0 0
  %1477 = vmatprep.subr.bf16.mxu0 0
  %1478 = vmatpush1.bf16.msra.mxu0 0
  %1479 = vmatprep.subr.bf16.mxu0 0
  %1480 = vmatpush1.bf16.msra.mxu0 0
  %1481 = vmatprep.mubr.bf16.mxu0 0
  %1482 = vmatmul.mubr.bf16.gmra.mrb[0].mxu0 %v1448
  %v1483 = vpop.f32.mrb[0].mxu0
  %v1484 = vadd.f32 0.0, %v1483
  %v1485 = vpop.f32.mrb[0].mxu0
  %v1486 = vpop.f32.mrb[0].mxu0
  %v1487 = vadd.f32 0.0, %v1486
  %v1488 = vpop.f32.mrb[0].mxu0
  %1489 = vdwg.mxu0
  %v1490 = vadd.f32 %v1412, %v1484
  %v1491 = vadd.f32 %v1415, %v1487
  %v1492 = vtanh.pop %v1490
  %v1493 = vtanh.pop %v1491
  %v1494 = vsub.f32 1.0, %v1429
  %v1495 = vsub.f32 1.0, %v1431
  %v1496 = vmul.f32 %v1494, %v1155
  %v1497 = vmul.f32 %v1495, %v1156
  %v1498 = vmul.f32 %v1429, %v1492
  %v1499 = vmul.f32 %v1431, %v1493
  %v1500 = vadd.f32 %v1496, %v1498
  %v1501 = vadd.f32 %v1497, %v1499
  %1502 = vst [vmem:[%s5] sm:$0xff] %v1500
  %1503 = vst [vmem:[%s5 + $0x8] sm:$0xff] %v1501
  // Predicated region
  $region22: #{ggnn_forward.1} parent=0 // pred_check
    _
  $region23: #{ggnn_forward.1} parent=0 // pred_check_branch
    %1505 = sbr.rel (0) target = $region25
  $region24: #{ggnn_forward.1} parent=0 // pred_region
    _
  $region25: #{ggnn_forward.1} parent=0 // pred_fallthru
    _
  // Predicated region
  $region26: #{ggnn_forward.1} parent=0 // pred_check
    _
  $region27: #{ggnn_forward.1} parent=0 // pred_check_branch
    %1507 = sbr.rel (0) target = $region29
  $region28: #{ggnn_forward.1} parent=0 // pred_region
    _
  $region29: #{ggnn_forward.1} parent=0 // pred_fallthru
    _

</llo_original>
